<compile_context>
chip_gen: v5e
topology: v5e:2x2
jax: 0.10.0
libtpu: 0.0.40
codegen_flags: <defaults>
</compile_context>

<pallas_src>
import jax
import jax.numpy as jnp
from jax.experimental import pallas as pl
from jax.experimental.pallas import tpu as pltpu


# ----------------------------- Pallas kernel --------------------------------
def _osg_decoder_kernel(x_ref, w1_ref, b1_ref, w2_ref, b2_ref, o_ref):
    # x_ref : (P, TM, C) slab of sampled_features for one (n, m-tile) grid cell
    # w1_ref: (C, H) pre-scaled by 1/P, feature dtype (bf16 feeds the MXU)
    # b1_ref: (1, H) f32 ; w2_ref: (H, O) feature dtype ; b2_ref: (1, O) f32
    # o_ref : (TM, O) f32
    w1 = w1_ref[...]
    n_planes = x_ref.shape[0]

    # FC1 with the plane mean folded in: sum_p x[p] @ (w1 / P), f32 accumulation.
    acc = jnp.dot(x_ref[0], w1, preferred_element_type=jnp.float32)
    for p in range(1, n_planes):  # P is small & static (3); unrolled
        acc = acc + jnp.dot(x_ref[p], w1, preferred_element_type=jnp.float32)
    h = acc + b1_ref[...]  # (TM, H) f32

    # Softplus (numerically stable; matches torch.nn.Softplus).
    h = jnp.maximum(h, 0.0) + jnp.log1p(jnp.exp(-jnp.abs(h)))

    # FC2 on the fast (bf16) MXU path, f32 accumulation.
    out = jnp.dot(h.astype(w2_ref.dtype), w2_ref[...],
                  preferred_element_type=jnp.float32) + b2_ref[...]
    o_ref[...] = out.astype(o_ref.dtype)


# ------------------------------- tiling helpers ------------------------------
_ROW_ALIGN = 128   # multiple of both the f32 (8) and bf16 (16) sublane minimums
_LANE = 128


def _pad_lanes(n):
    return ((n + _LANE - 1) // _LANE) * _LANE


def _vmem_bytes_per_row(P, C, H, O, feat_itemsize):
    """Lane-padded VMEM bytes per m-tile row (double-buffered pipeline blocks)."""
    x_blk = 2 * P * _pad_lanes(C) * feat_itemsize       # input block, 2 buffers
    o_blk = 2 * _pad_lanes(O) * 4                        # f32 output block, 2 buffers
    interm = _pad_lanes(H) * (4 + 4 + feat_itemsize)     # acc f32, softplus f32, bf16 h
    return x_blk + o_blk + interm


def _choose_row_tile(N, M, P, C, H, O, feat_itemsize, max_row_tile,
                     min_grid_steps=6, vmem_budget=24 * 1024 * 1024):
    """Largest 128-aligned m-tile within the lane-padded VMEM budget, while
    keeping >= ~min_grid_steps grid steps (v7x megacore wants >=3 per core).
    Small M falls back to a single full-M block (always a legal BlockSpec)."""
    per_row = _vmem_bytes_per_row(P, C, H, O, feat_itemsize)
    vmem_cap = max(_ROW_ALIGN, (vmem_budget // per_row) // _ROW_ALIGN * _ROW_ALIGN)
    cap = max(_ROW_ALIGN, (min(max_row_tile, vmem_cap) // _ROW_ALIGN) * _ROW_ALIGN)
    steps_cap = max(_ROW_ALIGN,
                    ((N * M) // min_grid_steps) // _ROW_ALIGN * _ROW_ALIGN)
    tm = min(cap, steps_cap)
    if M <= tm:
        return M                              # full-M block, no padding needed
    # Prefer an aligned tile that divides M exactly (no ragged trailing block).
    t = tm
    while t > _ROW_ALIGN and M % t:
        t -= _ROW_ALIGN
    return t if M % t == 0 else tm            # ragged tail handled by pl.cdiv grid


# ------------------------------- wrapper -------------------------------------
def osg_decoder_forward(sampled_features, w1, b1, w2, b2, *, max_row_tile=4096):
    """sampled_features: (N, n_planes, M, C) -> (N, M, 1 + decoder_output_dim)."""
    N, P, M, C = sampled_features.shape
    H = w1.shape[-1]
    O = w2.shape[-1]
    feat_dtype = sampled_features.dtype
    itemsize = jnp.dtype(feat_dtype).itemsize

    # Fold the 1/P of the plane mean into FC1's weights; keep both weight
    # matrices in the feature dtype so bf16 features use the fast MXU path.
    # (Intentional, tolerance-level precision change vs. the f32 PyTorch path.)
    w1s = (w1.astype(jnp.float32) / jnp.float32(P)).astype(feat_dtype)
    w2s = w2.astype(feat_dtype)
    b1_2d = b1.reshape(1, H).astype(jnp.float32)
    b2_2d = b2.reshape(1, O).astype(jnp.float32)

    tm = _choose_row_tile(N, M, P, C, H, O, itemsize, max_row_tile)
    # Ragged M: no jnp.pad copy of the big tensor.  Pallas bounds the boundary
    # DMAs and drops out-of-bounds writes; rows are independent, so the
    # trailing partial block needs no explicit masking.
    m_steps = pl.cdiv(M, tm)

    # Explicit scoped-VMEM limit sized from the lane-padded footprint
    # (v5e default is only 16 MiB; v7x physical ceiling is 64 MiB per core).
    est = _vmem_bytes_per_row(P, C, H, O, itemsize) * tm + (1 << 20)
    vmem_limit = int(min(48 * 1024 * 1024, max(32 * 1024 * 1024, 2 * est)))

    return pl.pallas_call(
        _osg_decoder_kernel,
        out_shape=jax.ShapeDtypeStruct((N, M, O), jnp.float32),
        grid_spec=pltpu.PrefetchScalarGridSpec(
            num_scalar_prefetch=0,
            grid=(N, m_steps),
            in_specs=[
                # native (N, P, M, C) layout: the big tensor is read exactly once
                pl.BlockSpec((None, P, tm, C), lambda n, m: (n, 0, m, 0)),
                pl.BlockSpec((C, H), lambda n, m: (0, 0)),
                pl.BlockSpec((1, H), lambda n, m: (0, 0)),
                pl.BlockSpec((H, O), lambda n, m: (0, 0)),
                pl.BlockSpec((1, O), lambda n, m: (0, 0)),
            ],
            out_specs=pl.BlockSpec((None, tm, O), lambda n, m: (n, m, 0)),
        ),
        compiler_params=pltpu.CompilerParams(
            dimension_semantics=("parallel", "parallel"),
            vmem_limit_bytes=vmem_limit),
    )(sampled_features, w1s, b1_2d, w2s, b2_2d)


# ----------------------------- reference (pure JAX) --------------------------
def osg_decoder_reference(sampled_features, w1, b1, w2, b2):
    x = jnp.mean(sampled_features, axis=1)  # (N, M, C)
    N, M, C = x.shape
    x = x.reshape(N * M, C)
    h = x @ w1 + b1
    h = jax.nn.softplus(h)
    out = h @ w2 + b2
    return out.reshape(N, M, -1)


# ----------------------------------- main ------------------------------------
if __name__ == "__main__":
    # Shapes consistent with the module's forward (triplane decoder):
    N, P, M = 2, 3, 1024        # batch, n_planes, points
    n_features = 32             # C
    hidden_dim = 64             # fixed in __init__
    decoder_output_dim = 3      # options['decoder_output_dim']
    out_dim = 1 + decoder_output_dim

    key = jax.random.PRNGKey(0)
    k_x, k_w1, k_b1, k_w2, k_b2 = jax.random.split(key, 5)

    # Features stored in bf16 in HBM (halves the dominant DMA traffic);
    # all accumulation inside the kernel is f32.
    sampled_features = jax.random.normal(
        k_x, (N, P, M, n_features), jnp.float32).astype(jnp.bfloat16)

    # Deterministic synthetic parameters (FullyConnectedLayer gain folded in).
    w1 = jax.random.normal(k_w1, (n_features, hidden_dim), jnp.float32) / jnp.sqrt(
        jnp.float32(n_features))
    b1 = jax.random.normal(k_b1, (hidden_dim,), jnp.float32) * 0.1
    w2 = jax.random.normal(k_w2, (hidden_dim, out_dim), jnp.float32) / jnp.sqrt(
        jnp.float32(hidden_dim))
    b2 = jax.random.normal(k_b2, (out_dim,), jnp.float32) * 0.1

    run = jax.jit(osg_decoder_forward)
    out = jax.block_until_ready(run(sampled_features, w1, b1, w2, b2))

    # Reference in f32 on the same (bf16-rounded) features.
    ref = osg_decoder_reference(sampled_features.astype(jnp.float32),
                                w1, b1, w2, b2)
    assert out.shape == (N, M, out_dim), out.shape
    max_err = float(jnp.max(jnp.abs(out - ref)))
    assert jnp.allclose(out, ref, atol=5e-2, rtol=5e-2), max_err

    print("KERNEL_OK")
</pallas_src>

<mosaic_0001>
module attributes {stable_mosaic.version = 11 : i64} {
  func.func @_osg_decoder_kernel(%arg0: i32, %arg1: i32, %arg2: memref<1x3x256x32xbf16, #tpu.memory_space<vmem>>, %arg3: memref<32x64xbf16, #tpu.memory_space<vmem>>, %arg4: memref<1x64xf32, #tpu.memory_space<vmem>>, %arg5: memref<64x4xbf16, #tpu.memory_space<vmem>>, %arg6: memref<1x4xf32, #tpu.memory_space<vmem>>, %arg7: memref<1x256x4xf32, #tpu.memory_space<vmem>>) attributes {dimension_semantics = [#tpu.dimension_semantics<parallel>, #tpu.dimension_semantics<parallel>], iteration_bounds = array<i64: 2, 4>, scalar_prefetch = 0 : i64, scratch_operands = 0 : i64, tpu.core_type = #tpu.core_type<tc>, window_params = [{transform_indices = @transform_0, window_bounds = array<i64: 1, 3, 256, 32>}, {pipeline_mode = #tpu.pipeline_mode<synchronous>, transform_indices = @transform_1, window_bounds = array<i64: 32, 64>}, {pipeline_mode = #tpu.pipeline_mode<synchronous>, transform_indices = @transform_2, window_bounds = array<i64: 1, 64>}, {pipeline_mode = #tpu.pipeline_mode<synchronous>, transform_indices = @transform_3, window_bounds = array<i64: 64, 4>}, {pipeline_mode = #tpu.pipeline_mode<synchronous>, transform_indices = @transform_4, window_bounds = array<i64: 1, 4>}, {transform_indices = @transform_5, window_bounds = array<i64: 1, 256, 4>}]} {
    %c0 = arith.constant 0 : index
    %c0_0 = arith.constant 0 : index
    %0 = vector.load %arg3[%c0, %c0_0] : memref<32x64xbf16, #tpu.memory_space<vmem>>, vector<32x64xbf16>
    %c0_1 = arith.constant 0 : index
    %c0_2 = arith.constant 0 : index
    %c0_3 = arith.constant 0 : index
    %c0_4 = arith.constant 0 : index
    %1 = vector.load %arg2[%c0_1, %c0_2, %c0_3, %c0_4] : memref<1x3x256x32xbf16, #tpu.memory_space<vmem>>, vector<1x1x256x32xbf16>
    %2 = vector.shape_cast %1 : vector<1x1x256x32xbf16> to vector<256x32xbf16>
    %cst = arith.constant dense<0.000000e+00> : vector<256x64xf32>
    %3 = tpu.matmul %2, %0, %cst {dimension_numbers = #tpu.dot_dimension_numbers<[1], [0], [0], [1], [0, 0, 1, 1], [], []>} : vector<256x32xbf16>, vector<32x64xbf16>, vector<256x64xf32> -> vector<256x64xf32>
    %c0_5 = arith.constant 0 : index
    %c1 = arith.constant 1 : index
    %c0_6 = arith.constant 0 : index
    %c0_7 = arith.constant 0 : index
    %4 = vector.load %arg2[%c0_5, %c1, %c0_6, %c0_7] : memref<1x3x256x32xbf16, #tpu.memory_space<vmem>>, vector<1x1x256x32xbf16>
    %5 = vector.shape_cast %4 : vector<1x1x256x32xbf16> to vector<256x32xbf16>
    %cst_8 = arith.constant dense<0.000000e+00> : vector<256x64xf32>
    %6 = tpu.matmul %5, %0, %cst_8 {dimension_numbers = #tpu.dot_dimension_numbers<[1], [0], [0], [1], [0, 0, 1, 1], [], []>} : vector<256x32xbf16>, vector<32x64xbf16>, vector<256x64xf32> -> vector<256x64xf32>
    %7 = arith.addf %3, %6 : vector<256x64xf32>
    %c0_9 = arith.constant 0 : index
    %c2 = arith.constant 2 : index
    %c0_10 = arith.constant 0 : index
    %c0_11 = arith.constant 0 : index
    %8 = vector.load %arg2[%c0_9, %c2, %c0_10, %c0_11] : memref<1x3x256x32xbf16, #tpu.memory_space<vmem>>, vector<1x1x256x32xbf16>
    %9 = vector.shape_cast %8 : vector<1x1x256x32xbf16> to vector<256x32xbf16>
    %cst_12 = arith.constant dense<0.000000e+00> : vector<256x64xf32>
    %10 = tpu.matmul %9, %0, %cst_12 {dimension_numbers = #tpu.dot_dimension_numbers<[1], [0], [0], [1], [0, 0, 1, 1], [], []>} : vector<256x32xbf16>, vector<32x64xbf16>, vector<256x64xf32> -> vector<256x64xf32>
    %11 = arith.addf %7, %10 : vector<256x64xf32>
    %c0_13 = arith.constant 0 : index
    %c0_14 = arith.constant 0 : index
    %12 = vector.load %arg4[%c0_13, %c0_14] : memref<1x64xf32, #tpu.memory_space<vmem>>, vector<1x64xf32>
    %13 = vector.broadcast %12 : vector<1x64xf32> to vector<256x64xf32>
    %14 = arith.addf %11, %13 : vector<256x64xf32>
    %cst_15 = arith.constant 0.000000e+00 : f32
    %15 = vector.broadcast %cst_15 : f32 to vector<256x64xf32>
    %16 = arith.maximumf %14, %15 : vector<256x64xf32>
    %17 = math.absf %14 : vector<256x64xf32>
    %cst_16 = arith.constant 0.000000e+00 : f32
    %18 = vector.broadcast %cst_16 : f32 to vector<256x64xf32>
    %19 = arith.subf %18, %17 : vector<256x64xf32>
    %20 = math.exp %19 : vector<256x64xf32>
    %21 = math.log1p %20 : vector<256x64xf32>
    %22 = arith.addf %16, %21 : vector<256x64xf32>
    %23 = arith.truncf %22 : vector<256x64xf32> to vector<256x64xbf16>
    %c0_17 = arith.constant 0 : index
    %c0_18 = arith.constant 0 : index
    %24 = vector.load %arg5[%c0_17, %c0_18] : memref<64x4xbf16, #tpu.memory_space<vmem>>, vector<64x4xbf16>
    %cst_19 = arith.constant dense<0.000000e+00> : vector<256x4xf32>
    %25 = tpu.matmul %23, %24, %cst_19 {dimension_numbers = #tpu.dot_dimension_numbers<[1], [0], [0], [1], [0, 0, 1, 1], [], []>} : vector<256x64xbf16>, vector<64x4xbf16>, vector<256x4xf32> -> vector<256x4xf32>
    %c0_20 = arith.constant 0 : index
    %c0_21 = arith.constant 0 : index
    %26 = vector.load %arg6[%c0_20, %c0_21] : memref<1x4xf32, #tpu.memory_space<vmem>>, vector<1x4xf32>
    %27 = vector.broadcast %26 : vector<1x4xf32> to vector<256x4xf32>
    %28 = arith.addf %25, %27 : vector<256x4xf32>
    %c0_22 = arith.constant 0 : index
    %c0_23 = arith.constant 0 : index
    %c0_24 = arith.constant 0 : index
    %29 = vector.load %arg7[%c0_22, %c0_23, %c0_24] : memref<1x256x4xf32, #tpu.memory_space<vmem>>, vector<1x256x4xf32>
    %30 = vector.shape_cast %29 : vector<1x256x4xf32> to vector<256x4xf32>
    %31 = vector.shape_cast %28 : vector<256x4xf32> to vector<1x256x4xf32>
    tpu.vector_store %arg7[%c0_22, %c0_23, %c0_24], %31 {strides = array<i32>} : memref<1x256x4xf32, #tpu.memory_space<vmem>>, vector<1x256x4xf32>,
    return
  }
  func.func @transform_0(%arg0: i32, %arg1: i32) -> (i32, i32, i32, i32) {
    %c0_i32 = arith.constant 0 : i32
    %c0_i32_0 = arith.constant 0 : i32
    %c0_i32_1 = arith.constant 0 : i32
    return %arg0, %c0_i32, %arg1, %c0_i32_0 : i32, i32, i32, i32
  }
  func.func @transform_1(%arg0: i32, %arg1: i32) -> (i32, i32) {
    %c0_i32 = arith.constant 0 : i32
    %c0_i32_0 = arith.constant 0 : i32
    %c0_i32_1 = arith.constant 0 : i32
    return %c0_i32, %c0_i32_0 : i32, i32
  }
  func.func @transform_2(%arg0: i32, %arg1: i32) -> (i32, i32) {
    %c0_i32 = arith.constant 0 : i32
    %c0_i32_0 = arith.constant 0 : i32
    %c0_i32_1 = arith.constant 0 : i32
    return %c0_i32, %c0_i32_0 : i32, i32
  }
  func.func @transform_3(%arg0: i32, %arg1: i32) -> (i32, i32) {
    %c0_i32 = arith.constant 0 : i32
    %c0_i32_0 = arith.constant 0 : i32
    %c0_i32_1 = arith.constant 0 : i32
    return %c0_i32, %c0_i32_0 : i32, i32
  }
  func.func @transform_4(%arg0: i32, %arg1: i32) -> (i32, i32) {
    %c0_i32 = arith.constant 0 : i32
    %c0_i32_0 = arith.constant 0 : i32
    %c0_i32_1 = arith.constant 0 : i32
    return %c0_i32, %c0_i32_0 : i32, i32
  }
  func.func @transform_5(%arg0: i32, %arg1: i32) -> (i32, i32, i32) {
    %c0_i32 = arith.constant 0 : i32
    %c0_i32_0 = arith.constant 0 : i32
    return %arg0, %arg1, %c0_i32 : i32, i32, i32
  }
}

</mosaic_0001>

<llo_original>
// kernel: osg_decoder_forward.1
$region0: #{osg_decoder_forward.1}
  #allocation0 [shape = 'u32[]', space=smem, size = 0x4, offset = 0x4, fixed_abs, tag = 'smem constant byte address 0x4 - core index']
  #allocation1 [shape = 'u32[72,128]{1,0:T(1,128)}', space=vmem, size = 0x9000, scoped, tag = 'internal scratch']
  %s0 = inlined_call_operand.vmem [shape: bf16[2,3,1024,32], index: 0, kind: input, shape index: {}]
  %s1 = inlined_call_operand.vmem [shape: bf16[32,64], index: 1, kind: input, shape index: {}]
  %s2 = inlined_call_operand.vmem [shape: f32[1,64], index: 2, kind: input, shape index: {}]
  %s3 = inlined_call_operand.vmem [shape: bf16[64,4], index: 3, kind: input, shape index: {}]
  %s4 = inlined_call_operand.vmem [shape: f32[1,4], index: 4, kind: input, shape index: {}]
  %s5 = inlined_call_operand.vmem [shape: f32[2,1024,4], index: 5, kind: output, shape index: {}]
  %s6 = sld [smem:[#allocation0]]
  $region94: #{osg_decoder_forward.1} parent=0
    _
  %s8 = ssub.s32 1, %s6
  %s9 = scalar_select 0, %s8, %s6
  $region1: #{osg_decoder_forward.1} parent=0
    #allocation2 [shape = 'u8[393216]{0}', space=vmem, size = 0x60000, scoped, tag = 'input window, operand 0']
    loop: start=0, step=1, limit=10
    $region2: #{osg_decoder_forward.1} parent=1 // loop_pre_header
      _
    $region3: #{osg_decoder_forward.1} parent=1 // loop_header
      %s11 = sphi 0, %s15
      %p12 = scmp.ge.s32.totalorder %s11, 10
      %s18 = sphi 0, %s30
      %s19 = sphi 0, %s26
      %s20 = sphi 0, %s18
      %s21 = sphi 0, %s19
      %s22 = sphi 0, %s20
      %s23 = sphi 0, %s21
      %s35 = sphi 0, %s37
      %s38 = sphi 0, %s35
      %s39 = sphi 0, %s38
      %s55 = sphi 0, %s39
      %s59 = sphi 0, %s59
      %s61 = sphi 0, %s59
      %s62 = sphi 0, %s61
      %s76 = sphi 0, %s62
      %s80 = sphi 0, %s80
      %s82 = sphi 0, %s80
      %s83 = sphi 0, %s82
      %s97 = sphi 0, %s83
      %s101 = sphi 0, %s101
      %s103 = sphi 0, %s101
      %s104 = sphi 0, %s103
      %s118 = sphi 0, %s104
      %s122 = sphi 0, %s122
      %s124 = sphi 0, %s122
      %s125 = sphi 0, %s124
      %s139 = sphi 0, %s125
      %s147 = sphi 0, %s149
      %s150 = sphi 0, %s147
      %s151 = sphi 0, %s150
      %s167 = sphi 0, %s151
    $region4: #{osg_decoder_forward.1} parent=1 // loop_header_branch
      %14 = sbr.rel (%p12) target = $region8
    $region5: #{osg_decoder_forward.1} parent=1 // loop_body
      %s16 = ssub.s32 %s11, 1
      %s17 = ssub.s32 %s11, 2
      %s24 = sadd.s32 1, %s19
      %p25 = scmp.ge.s32.totalorder %s24, 4
      %s26 = scalar_select %p25, 0, %s24
      %s27 = sadd.s32 1, %s18
      %s28 = scalar_select %p25, %s27, %s18
      %p29 = scmp.ge.s32.totalorder %s28, 2
      %s30 = scalar_select %p29, 0, %s28
      %s31 = ssub.s32 %s18, %s30
      %s32 = ssub.s32 %s19, %s26
      %s33 = sor.u32 %s31, %s32
      %p34 = scmp.eq.s32.totalorder %s33, 0
      %s36 = sadd.s32 %s35, 1
      %s37 = scalar_select %p34, %s35, %s36
      %p40 = pneg %p34
      %p41 = scmp.eq.s32.totalorder %s11, 7
      %p42 = por %p40, %p41
      %p43 = scmp.ne.s32.totalorder %s35, %s38
      %p44 = scmp.eq.s32.totalorder %s11, 0
      %p45 = por %p43, %p44
      %p46 = scmp.ne.s32.totalorder %s35, %s38
      %p47 = scmp.eq.s32.totalorder %s16, 7
      %p48 = por %p46, %p47
      %p49 = scmp.ne.s32.totalorder %s38, %s39
      %p50 = scmp.eq.s32.totalorder %s16, 0
      %p51 = por %p49, %p50
      %p52 = scmp.ne.s32.totalorder %s38, %s39
      %p53 = scmp.eq.s32.totalorder %s17, 7
      %p54 = por %p52, %p53
      %p56 = scmp.ne.s32.totalorder %s39, %s55
      %p57 = scmp.eq.s32.totalorder %s17, 0
      %p58 = por %p56, %p57
      %s60 = sadd.s32 %s59, 1
      %p63 = scmp.eq.s32.totalorder %s11, 7
      %p64 = scmp.ne.s32.totalorder %s59, %s61
      %p65 = scmp.eq.s32.totalorder %s11, 0
      %p66 = por %p64, %p65
      %p67 = scmp.ne.s32.totalorder %s59, %s61
      %p68 = scmp.eq.s32.totalorder %s16, 7
      %p69 = por %p67, %p68
      %p70 = scmp.ne.s32.totalorder %s61, %s62
      %p71 = scmp.eq.s32.totalorder %s16, 0
      %p72 = por %p70, %p71
      %p73 = scmp.ne.s32.totalorder %s61, %s62
      %p74 = scmp.eq.s32.totalorder %s17, 7
      %p75 = por %p73, %p74
      %p77 = scmp.ne.s32.totalorder %s62, %s76
      %p78 = scmp.eq.s32.totalorder %s17, 0
      %p79 = por %p77, %p78
      %s81 = sadd.s32 %s80, 1
      %p84 = scmp.eq.s32.totalorder %s11, 7
      %p85 = scmp.ne.s32.totalorder %s80, %s82
      %p86 = scmp.eq.s32.totalorder %s11, 0
      %p87 = por %p85, %p86
      %p88 = scmp.ne.s32.totalorder %s80, %s82
      %p89 = scmp.eq.s32.totalorder %s16, 7
      %p90 = por %p88, %p89
      %p91 = scmp.ne.s32.totalorder %s82, %s83
      %p92 = scmp.eq.s32.totalorder %s16, 0
      %p93 = por %p91, %p92
      %p94 = scmp.ne.s32.totalorder %s82, %s83
      %p95 = scmp.eq.s32.totalorder %s17, 7
      %p96 = por %p94, %p95
      %p98 = scmp.ne.s32.totalorder %s83, %s97
      %p99 = scmp.eq.s32.totalorder %s17, 0
      %p100 = por %p98, %p99
      %s102 = sadd.s32 %s101, 1
      %p105 = scmp.eq.s32.totalorder %s11, 7
      %p106 = scmp.ne.s32.totalorder %s101, %s103
      %p107 = scmp.eq.s32.totalorder %s11, 0
      %p108 = por %p106, %p107
      %p109 = scmp.ne.s32.totalorder %s101, %s103
      %p110 = scmp.eq.s32.totalorder %s16, 7
      %p111 = por %p109, %p110
      %p112 = scmp.ne.s32.totalorder %s103, %s104
      %p113 = scmp.eq.s32.totalorder %s16, 0
      %p114 = por %p112, %p113
      %p115 = scmp.ne.s32.totalorder %s103, %s104
      %p116 = scmp.eq.s32.totalorder %s17, 7
      %p117 = por %p115, %p116
      %p119 = scmp.ne.s32.totalorder %s104, %s118
      %p120 = scmp.eq.s32.totalorder %s17, 0
      %p121 = por %p119, %p120
      %s123 = sadd.s32 %s122, 1
      %p126 = scmp.eq.s32.totalorder %s11, 7
      %p127 = scmp.ne.s32.totalorder %s122, %s124
      %p128 = scmp.eq.s32.totalorder %s11, 0
      %p129 = por %p127, %p128
      %p130 = scmp.ne.s32.totalorder %s122, %s124
      %p131 = scmp.eq.s32.totalorder %s16, 7
      %p132 = por %p130, %p131
      %p133 = scmp.ne.s32.totalorder %s124, %s125
      %p134 = scmp.eq.s32.totalorder %s16, 0
      %p135 = por %p133, %p134
      %p136 = scmp.ne.s32.totalorder %s124, %s125
      %p137 = scmp.eq.s32.totalorder %s17, 7
      %p138 = por %p136, %p137
      %p140 = scmp.ne.s32.totalorder %s125, %s139
      %p141 = scmp.eq.s32.totalorder %s17, 0
      %p142 = por %p140, %p141
      %s143 = ssub.s32 %s18, %s30
      %s144 = ssub.s32 %s19, %s26
      %s145 = sor.u32 %s143, %s144
      %p146 = scmp.eq.s32.totalorder %s145, 0
      %s148 = sadd.s32 %s147, 1
      %s149 = scalar_select %p146, %s147, %s148
      %p152 = pneg %p146
      %p153 = scmp.eq.s32.totalorder %s11, 7
      %p154 = por %p152, %p153
      %p155 = scmp.ne.s32.totalorder %s147, %s150
      %p156 = scmp.eq.s32.totalorder %s11, 0
      %p157 = por %p155, %p156
      %p158 = scmp.ne.s32.totalorder %s147, %s150
      %p159 = scmp.eq.s32.totalorder %s16, 7
      %p160 = por %p158, %p159
      %p161 = scmp.ne.s32.totalorder %s150, %s151
      %p162 = scmp.eq.s32.totalorder %s16, 0
      %p163 = por %p161, %p162
      %p164 = scmp.ne.s32.totalorder %s150, %s151
      %p165 = scmp.eq.s32.totalorder %s17, 7
      %p166 = por %p164, %p165
      %p168 = scmp.ne.s32.totalorder %s151, %s167
      %p169 = scmp.eq.s32.totalorder %s17, 0
      %p170 = por %p168, %p169
      %p171 = scmp.le.s32.totalorder 1, %s11
      %p172 = scmp.lt.s32.totalorder %s11, 9
      %p173 = pnand %p171, %p172
      %p174 = pneg %p173
      // Predicated region
      $region9: #{osg_decoder_forward.1} parent=5 // pred_check
        _
      $region10: #{osg_decoder_forward.1} parent=5 // pred_check_branch
        %176 = sbr.rel (%p173) target = $region12
      $region11: #{osg_decoder_forward.1} parent=5 // pred_region
        %s177 = ssub.s32 %s11, 1
        // Predicated region
        $region13: #{osg_decoder_forward.1} parent=11 // pred_check
          %p178 = pneg %p72
        $region14: #{osg_decoder_forward.1} parent=11 // pred_check_branch
          %180 = sbr.rel (%p178) target = $region16
        $region15: #{osg_decoder_forward.1} parent=11 // pred_region
          _
        $region16: #{osg_decoder_forward.1} parent=11 // pred_fallthru
          _
        // Predicated region
        $region17: #{osg_decoder_forward.1} parent=11 // pred_check
          %p181 = pneg %p93
        $region18: #{osg_decoder_forward.1} parent=11 // pred_check_branch
          %183 = sbr.rel (%p181) target = $region20
        $region19: #{osg_decoder_forward.1} parent=11 // pred_region
          _
        $region20: #{osg_decoder_forward.1} parent=11 // pred_fallthru
          _
        // Predicated region
        $region21: #{osg_decoder_forward.1} parent=11 // pred_check
          %p184 = pneg %p114
        $region22: #{osg_decoder_forward.1} parent=11 // pred_check_branch
          %186 = sbr.rel (%p184) target = $region24
        $region23: #{osg_decoder_forward.1} parent=11 // pred_region
          _
        $region24: #{osg_decoder_forward.1} parent=11 // pred_fallthru
          _
        // Predicated region
        $region25: #{osg_decoder_forward.1} parent=11 // pred_check
          %p187 = pneg %p135
        $region26: #{osg_decoder_forward.1} parent=11 // pred_check_branch
          %189 = sbr.rel (%p187) target = $region28
        $region27: #{osg_decoder_forward.1} parent=11 // pred_region
          _
        $region28: #{osg_decoder_forward.1} parent=11 // pred_fallthru
          _
      $region12: #{osg_decoder_forward.1} parent=5 // pred_fallthru
        _
      %p190 = scmp.lt.s32.totalorder %s11, 8
      // Predicated region
      $region29: #{osg_decoder_forward.1} parent=5 // pred_check
        %p191 = pneg %p190
      $region30: #{osg_decoder_forward.1} parent=5 // pred_check_branch
        %193 = sbr.rel (%p191) target = $region32
      $region31: #{osg_decoder_forward.1} parent=5 // pred_region
        // Predicated region
        $region33: #{osg_decoder_forward.1} parent=31 // pred_check
          %p194 = pneg %p45
        $region34: #{osg_decoder_forward.1} parent=31 // pred_check_branch
          %196 = sbr.rel (%p194) target = $region36
        $region35: #{osg_decoder_forward.1} parent=31 // pred_region
          %s197 = sand.u32 %s35, 1
          %s198 = sand.u32 %s35, 1
          %s199 = smul.addr %s198, 384
          %s200 = scalar_lea.vmem [#allocation2], %s199
          %s201 = smul.u32 32, %s19
          %s202 = smul.addr %s18, 384
          %s203 = sadd.s32 %s201, %s202
          %s204 = smul.addr %s203, 4
          %s205 = scalar_lea.vmem %s0, %s204
          // Predicated region
          $region37: #{osg_decoder_forward.1} parent=35 // pred_check
            _
          $region38: #{osg_decoder_forward.1} parent=35 // pred_check_branch
            %207 = sbr.rel (0) target = $region40
          $region39: #{osg_decoder_forward.1} parent=35 // pred_region
            // Predicated region
            $region41: #{osg_decoder_forward.1} parent=39 // pred_check
              _
            $region42: #{osg_decoder_forward.1} parent=39 // pred_check_branch
              %209 = sbr.rel target = $region44
            $region43: #{osg_decoder_forward.1} parent=39 // pred_region
              // Predicated region
              $region56: #{osg_decoder_forward.1} parent=43 // pred_check
                _
              $region57: #{osg_decoder_forward.1} parent=43 // pred_check_branch
                %415 = sbr.rel (0) target = $region59
              $region58: #{osg_decoder_forward.1} parent=43 // pred_region
                loop: start=0, step=1, limit=1
                $region60: #{osg_decoder_forward.1} parent=58 // loop_pre_header
                  _
                $region61: #{osg_decoder_forward.1} parent=58 // loop_header
                  %s417 = sphi 0, %s421
                  %p418 = scmp.ge.s32.totalorder %s417, 1
                  %s422 = sphi %s205, %s205
                  %s423 = sphi %s200, %s200
                $region62: #{osg_decoder_forward.1} parent=58 // loop_header_branch
                  %420 = sbr.rel (%p418) target = $region66
                $region63: #{osg_decoder_forward.1} parent=58 // loop_body
                  _
                $region64: #{osg_decoder_forward.1} parent=58 // loop_footer
                  %s421 = sadd.s32 1, %s417
                $region65: #{osg_decoder_forward.1} parent=58 // loop_footer_branch
                  %416 = sbr.rel target = $region61
                $region66: #{osg_decoder_forward.1} parent=58 // loop_exit
                  _
                %s425 = ssub.s32 16, 1
                loop: start=0, step=1, limit=1
                $region67: #{osg_decoder_forward.1} parent=58 // loop_pre_header
                  _
                $region68: #{osg_decoder_forward.1} parent=58 // loop_header
                  %s427 = sphi 0, %s431
                  %p428 = scmp.ge.s32.totalorder %s427, 1
                  %s432 = sphi %s205, %s205
                  %s433 = sphi %s200, %s200
                $region69: #{osg_decoder_forward.1} parent=58 // loop_header_branch
                  %430 = sbr.rel (%p428) target = $region73
                $region70: #{osg_decoder_forward.1} parent=58 // loop_body
                  %v434 = vld [vmem:[%s432] sm:%s425]
                  %435 = vst [vmem:[%s433] sm:%s425] %v434
                  %v436 = vld [vmem:[%s432 + $0x4] sm:%s425]
                  %437 = vst [vmem:[%s433 + $0x4] sm:%s425] %v436
                  %v438 = vld [vmem:[%s432 + $0x8] sm:%s425]
                  %439 = vst [vmem:[%s433 + $0x8] sm:%s425] %v438
                  %v440 = vld [vmem:[%s432 + $0xc] sm:%s425]
                  %441 = vst [vmem:[%s433 + $0xc] sm:%s425] %v440
                  %v442 = vld [vmem:[%s432 + $0x10] sm:%s425]
                  %443 = vst [vmem:[%s433 + $0x10] sm:%s425] %v442
                  %v444 = vld [vmem:[%s432 + $0x14] sm:%s425]
                  %445 = vst [vmem:[%s433 + $0x14] sm:%s425] %v444
                  %v446 = vld [vmem:[%s432 + $0x18] sm:%s425]
                  %447 = vst [vmem:[%s433 + $0x18] sm:%s425] %v446
                  %v448 = vld [vmem:[%s432 + $0x1c] sm:%s425]
                  %449 = vst [vmem:[%s433 + $0x1c] sm:%s425] %v448
                  %v450 = vld [vmem:[%s432 + $0x20] sm:%s425]
                  %451 = vst [vmem:[%s433 + $0x20] sm:%s425] %v450
                  %v452 = vld [vmem:[%s432 + $0x24] sm:%s425]
                  %453 = vst [vmem:[%s433 + $0x24] sm:%s425] %v452
                  %v454 = vld [vmem:[%s432 + $0x28] sm:%s425]
                  %455 = vst [vmem:[%s433 + $0x28] sm:%s425] %v454
                  %v456 = vld [vmem:[%s432 + $0x2c] sm:%s425]
                  %457 = vst [vmem:[%s433 + $0x2c] sm:%s425] %v456
                  %v458 = vld [vmem:[%s432 + $0x30] sm:%s425]
                  %459 = vst [vmem:[%s433 + $0x30] sm:%s425] %v458
                  %v460 = vld [vmem:[%s432 + $0x34] sm:%s425]
                  %461 = vst [vmem:[%s433 + $0x34] sm:%s425] %v460
                  %v462 = vld [vmem:[%s432 + $0x38] sm:%s425]
                  %463 = vst [vmem:[%s433 + $0x38] sm:%s425] %v462
                  %v464 = vld [vmem:[%s432 + $0x3c] sm:%s425]
                  %465 = vst [vmem:[%s433 + $0x3c] sm:%s425] %v464
                  %v466 = vld [vmem:[%s432 + $0x40] sm:%s425]
                  %467 = vst [vmem:[%s433 + $0x40] sm:%s425] %v466
                  %v468 = vld [vmem:[%s432 + $0x44] sm:%s425]
                  %469 = vst [vmem:[%s433 + $0x44] sm:%s425] %v468
                  %v470 = vld [vmem:[%s432 + $0x48] sm:%s425]
                  %471 = vst [vmem:[%s433 + $0x48] sm:%s425] %v470
                  %v472 = vld [vmem:[%s432 + $0x4c] sm:%s425]
                  %473 = vst [vmem:[%s433 + $0x4c] sm:%s425] %v472
                  %v474 = vld [vmem:[%s432 + $0x50] sm:%s425]
                  %475 = vst [vmem:[%s433 + $0x50] sm:%s425] %v474
                  %v476 = vld [vmem:[%s432 + $0x54] sm:%s425]
                  %477 = vst [vmem:[%s433 + $0x54] sm:%s425] %v476
                  %v478 = vld [vmem:[%s432 + $0x58] sm:%s425]
                  %479 = vst [vmem:[%s433 + $0x58] sm:%s425] %v478
                  %v480 = vld [vmem:[%s432 + $0x5c] sm:%s425]
                  %481 = vst [vmem:[%s433 + $0x5c] sm:%s425] %v480
                  %v482 = vld [vmem:[%s432 + $0x60] sm:%s425]
                  %483 = vst [vmem:[%s433 + $0x60] sm:%s425] %v482
                  %v484 = vld [vmem:[%s432 + $0x64] sm:%s425]
                  %485 = vst [vmem:[%s433 + $0x64] sm:%s425] %v484
                  %v486 = vld [vmem:[%s432 + $0x68] sm:%s425]
                  %487 = vst [vmem:[%s433 + $0x68] sm:%s425] %v486
                  %v488 = vld [vmem:[%s432 + $0x6c] sm:%s425]
                  %489 = vst [vmem:[%s433 + $0x6c] sm:%s425] %v488
                  %v490 = vld [vmem:[%s432 + $0x70] sm:%s425]
                  %491 = vst [vmem:[%s433 + $0x70] sm:%s425] %v490
                  %v492 = vld [vmem:[%s432 + $0x74] sm:%s425]
                  %493 = vst [vmem:[%s433 + $0x74] sm:%s425] %v492
                  %v494 = vld [vmem:[%s432 + $0x78] sm:%s425]
                  %495 = vst [vmem:[%s433 + $0x78] sm:%s425] %v494
                  %v496 = vld [vmem:[%s432 + $0x7c] sm:%s425]
                  %497 = vst [vmem:[%s433 + $0x7c] sm:%s425] %v496
                  %v498 = vld [vmem:[%s432 + $0x200] sm:%s425]
                  %499 = vst [vmem:[%s433 + $0x80] sm:%s425] %v498
                  %v500 = vld [vmem:[%s432 + $0x204] sm:%s425]
                  %501 = vst [vmem:[%s433 + $0x84] sm:%s425] %v500
                  %v502 = vld [vmem:[%s432 + $0x208] sm:%s425]
                  %503 = vst [vmem:[%s433 + $0x88] sm:%s425] %v502
                  %v504 = vld [vmem:[%s432 + $0x20c] sm:%s425]
                  %505 = vst [vmem:[%s433 + $0x8c] sm:%s425] %v504
                  %v506 = vld [vmem:[%s432 + $0x210] sm:%s425]
                  %507 = vst [vmem:[%s433 + $0x90] sm:%s425] %v506
                  %v508 = vld [vmem:[%s432 + $0x214] sm:%s425]
                  %509 = vst [vmem:[%s433 + $0x94] sm:%s425] %v508
                  %v510 = vld [vmem:[%s432 + $0x218] sm:%s425]
                  %511 = vst [vmem:[%s433 + $0x98] sm:%s425] %v510
                  %v512 = vld [vmem:[%s432 + $0x21c] sm:%s425]
                  %513 = vst [vmem:[%s433 + $0x9c] sm:%s425] %v512
                  %v514 = vld [vmem:[%s432 + $0x220] sm:%s425]
                  %515 = vst [vmem:[%s433 + $0xa0] sm:%s425] %v514
                  %v516 = vld [vmem:[%s432 + $0x224] sm:%s425]
                  %517 = vst [vmem:[%s433 + $0xa4] sm:%s425] %v516
                  %v518 = vld [vmem:[%s432 + $0x228] sm:%s425]
                  %519 = vst [vmem:[%s433 + $0xa8] sm:%s425] %v518
                  %v520 = vld [vmem:[%s432 + $0x22c] sm:%s425]
                  %521 = vst [vmem:[%s433 + $0xac] sm:%s425] %v520
                  %v522 = vld [vmem:[%s432 + $0x230] sm:%s425]
                  %523 = vst [vmem:[%s433 + $0xb0] sm:%s425] %v522
                  %v524 = vld [vmem:[%s432 + $0x234] sm:%s425]
                  %525 = vst [vmem:[%s433 + $0xb4] sm:%s425] %v524
                  %v526 = vld [vmem:[%s432 + $0x238] sm:%s425]
                  %527 = vst [vmem:[%s433 + $0xb8] sm:%s425] %v526
                  %v528 = vld [vmem:[%s432 + $0x23c] sm:%s425]
                  %529 = vst [vmem:[%s433 + $0xbc] sm:%s425] %v528
                  %v530 = vld [vmem:[%s432 + $0x240] sm:%s425]
                  %531 = vst [vmem:[%s433 + $0xc0] sm:%s425] %v530
                  %v532 = vld [vmem:[%s432 + $0x244] sm:%s425]
                  %533 = vst [vmem:[%s433 + $0xc4] sm:%s425] %v532
                  %v534 = vld [vmem:[%s432 + $0x248] sm:%s425]
                  %535 = vst [vmem:[%s433 + $0xc8] sm:%s425] %v534
                  %v536 = vld [vmem:[%s432 + $0x24c] sm:%s425]
                  %537 = vst [vmem:[%s433 + $0xcc] sm:%s425] %v536
                  %v538 = vld [vmem:[%s432 + $0x250] sm:%s425]
                  %539 = vst [vmem:[%s433 + $0xd0] sm:%s425] %v538
                  %v540 = vld [vmem:[%s432 + $0x254] sm:%s425]
                  %541 = vst [vmem:[%s433 + $0xd4] sm:%s425] %v540
                  %v542 = vld [vmem:[%s432 + $0x258] sm:%s425]
                  %543 = vst [vmem:[%s433 + $0xd8] sm:%s425] %v542
                  %v544 = vld [vmem:[%s432 + $0x25c] sm:%s425]
                  %545 = vst [vmem:[%s433 + $0xdc] sm:%s425] %v544
                  %v546 = vld [vmem:[%s432 + $0x260] sm:%s425]
                  %547 = vst [vmem:[%s433 + $0xe0] sm:%s425] %v546
                  %v548 = vld [vmem:[%s432 + $0x264] sm:%s425]
                  %549 = vst [vmem:[%s433 + $0xe4] sm:%s425] %v548
                  %v550 = vld [vmem:[%s432 + $0x268] sm:%s425]
                  %551 = vst [vmem:[%s433 + $0xe8] sm:%s425] %v550
                  %v552 = vld [vmem:[%s432 + $0x26c] sm:%s425]
                  %553 = vst [vmem:[%s433 + $0xec] sm:%s425] %v552
                  %v554 = vld [vmem:[%s432 + $0x270] sm:%s425]
                  %555 = vst [vmem:[%s433 + $0xf0] sm:%s425] %v554
                  %v556 = vld [vmem:[%s432 + $0x274] sm:%s425]
                  %557 = vst [vmem:[%s433 + $0xf4] sm:%s425] %v556
                  %v558 = vld [vmem:[%s432 + $0x278] sm:%s425]
                  %559 = vst [vmem:[%s433 + $0xf8] sm:%s425] %v558
                  %v560 = vld [vmem:[%s432 + $0x27c] sm:%s425]
                  %561 = vst [vmem:[%s433 + $0xfc] sm:%s425] %v560
                  %v562 = vld [vmem:[%s432 + $0x400] sm:%s425]
                  %563 = vst [vmem:[%s433 + $0x100] sm:%s425] %v562
                  %v564 = vld [vmem:[%s432 + $0x404] sm:%s425]
                  %565 = vst [vmem:[%s433 + $0x104] sm:%s425] %v564
                  %v566 = vld [vmem:[%s432 + $0x408] sm:%s425]
                  %567 = vst [vmem:[%s433 + $0x108] sm:%s425] %v566
                  %v568 = vld [vmem:[%s432 + $0x40c] sm:%s425]
                  %569 = vst [vmem:[%s433 + $0x10c] sm:%s425] %v568
                  %v570 = vld [vmem:[%s432 + $0x410] sm:%s425]
                  %571 = vst [vmem:[%s433 + $0x110] sm:%s425] %v570
                  %v572 = vld [vmem:[%s432 + $0x414] sm:%s425]
                  %573 = vst [vmem:[%s433 + $0x114] sm:%s425] %v572
                  %v574 = vld [vmem:[%s432 + $0x418] sm:%s425]
                  %575 = vst [vmem:[%s433 + $0x118] sm:%s425] %v574
                  %v576 = vld [vmem:[%s432 + $0x41c] sm:%s425]
                  %577 = vst [vmem:[%s433 + $0x11c] sm:%s425] %v576
                  %v578 = vld [vmem:[%s432 + $0x420] sm:%s425]
                  %579 = vst [vmem:[%s433 + $0x120] sm:%s425] %v578
                  %v580 = vld [vmem:[%s432 + $0x424] sm:%s425]
                  %581 = vst [vmem:[%s433 + $0x124] sm:%s425] %v580
                  %v582 = vld [vmem:[%s432 + $0x428] sm:%s425]
                  %583 = vst [vmem:[%s433 + $0x128] sm:%s425] %v582
                  %v584 = vld [vmem:[%s432 + $0x42c] sm:%s425]
                  %585 = vst [vmem:[%s433 + $0x12c] sm:%s425] %v584
                  %v586 = vld [vmem:[%s432 + $0x430] sm:%s425]
                  %587 = vst [vmem:[%s433 + $0x130] sm:%s425] %v586
                  %v588 = vld [vmem:[%s432 + $0x434] sm:%s425]
                  %589 = vst [vmem:[%s433 + $0x134] sm:%s425] %v588
                  %v590 = vld [vmem:[%s432 + $0x438] sm:%s425]
                  %591 = vst [vmem:[%s433 + $0x138] sm:%s425] %v590
                  %v592 = vld [vmem:[%s432 + $0x43c] sm:%s425]
                  %593 = vst [vmem:[%s433 + $0x13c] sm:%s425] %v592
                  %v594 = vld [vmem:[%s432 + $0x440] sm:%s425]
                  %595 = vst [vmem:[%s433 + $0x140] sm:%s425] %v594
                  %v596 = vld [vmem:[%s432 + $0x444] sm:%s425]
                  %597 = vst [vmem:[%s433 + $0x144] sm:%s425] %v596
                  %v598 = vld [vmem:[%s432 + $0x448] sm:%s425]
                  %599 = vst [vmem:[%s433 + $0x148] sm:%s425] %v598
                  %v600 = vld [vmem:[%s432 + $0x44c] sm:%s425]
                  %601 = vst [vmem:[%s433 + $0x14c] sm:%s425] %v600
                  %v602 = vld [vmem:[%s432 + $0x450] sm:%s425]
                  %603 = vst [vmem:[%s433 + $0x150] sm:%s425] %v602
                  %v604 = vld [vmem:[%s432 + $0x454] sm:%s425]
                  %605 = vst [vmem:[%s433 + $0x154] sm:%s425] %v604
                  %v606 = vld [vmem:[%s432 + $0x458] sm:%s425]
                  %607 = vst [vmem:[%s433 + $0x158] sm:%s425] %v606
                  %v608 = vld [vmem:[%s432 + $0x45c] sm:%s425]
                  %609 = vst [vmem:[%s433 + $0x15c] sm:%s425] %v608
                  %v610 = vld [vmem:[%s432 + $0x460] sm:%s425]
                  %611 = vst [vmem:[%s433 + $0x160] sm:%s425] %v610
                  %v612 = vld [vmem:[%s432 + $0x464] sm:%s425]
                  %613 = vst [vmem:[%s433 + $0x164] sm:%s425] %v612
                  %v614 = vld [vmem:[%s432 + $0x468] sm:%s425]
                  %615 = vst [vmem:[%s433 + $0x168] sm:%s425] %v614
                  %v616 = vld [vmem:[%s432 + $0x46c] sm:%s425]
                  %617 = vst [vmem:[%s433 + $0x16c] sm:%s425] %v616
                  %v618 = vld [vmem:[%s432 + $0x470] sm:%s425]
                  %619 = vst [vmem:[%s433 + $0x170] sm:%s425] %v618
                  %v620 = vld [vmem:[%s432 + $0x474] sm:%s425]
                  %621 = vst [vmem:[%s433 + $0x174] sm:%s425] %v620
                  %v622 = vld [vmem:[%s432 + $0x478] sm:%s425]
                  %623 = vst [vmem:[%s433 + $0x178] sm:%s425] %v622
                  %v624 = vld [vmem:[%s432 + $0x47c] sm:%s425]
                  %625 = vst [vmem:[%s433 + $0x17c] sm:%s425] %v624
                $region71: #{osg_decoder_forward.1} parent=58 // loop_footer
                  %s431 = sadd.s32 1, %s427
                $region72: #{osg_decoder_forward.1} parent=58 // loop_footer_branch
                  %426 = sbr.rel target = $region68
                $region73: #{osg_decoder_forward.1} parent=58 // loop_exit
                  _
              $region59: #{osg_decoder_forward.1} parent=43 // pred_fallthru
                _
            $region44: #{osg_decoder_forward.1} parent=39 // pred_fallthru
              _
            // Predicated region
            $region45: #{osg_decoder_forward.1} parent=39 // pred_check
              _
            $region46: #{osg_decoder_forward.1} parent=39 // pred_check_branch
              %211 = sbr.rel (0) target = $region48
            $region47: #{osg_decoder_forward.1} parent=39 // pred_region
              %s213 = ssub.s32 16, 1
              loop: start=0, step=1, limit=1
              $region49: #{osg_decoder_forward.1} parent=47 // loop_pre_header
                _
              $region50: #{osg_decoder_forward.1} parent=47 // loop_header
                %s215 = sphi 0, %s219
                %p216 = scmp.ge.s32.totalorder %s215, 1
                %s220 = sphi %s205, %s205
                %s221 = sphi %s200, %s200
              $region51: #{osg_decoder_forward.1} parent=47 // loop_header_branch
                %218 = sbr.rel (%p216) target = $region55
              $region52: #{osg_decoder_forward.1} parent=47 // loop_body
                %v222 = vld [vmem:[%s220] sm:%s213]
                %223 = vst [vmem:[%s221] sm:%s213] %v222
                %v224 = vld [vmem:[%s220 + $0x4] sm:%s213]
                %225 = vst [vmem:[%s221 + $0x4] sm:%s213] %v224
                %v226 = vld [vmem:[%s220 + $0x8] sm:%s213]
                %227 = vst [vmem:[%s221 + $0x8] sm:%s213] %v226
                %v228 = vld [vmem:[%s220 + $0xc] sm:%s213]
                %229 = vst [vmem:[%s221 + $0xc] sm:%s213] %v228
                %v230 = vld [vmem:[%s220 + $0x10] sm:%s213]
                %231 = vst [vmem:[%s221 + $0x10] sm:%s213] %v230
                %v232 = vld [vmem:[%s220 + $0x14] sm:%s213]
                %233 = vst [vmem:[%s221 + $0x14] sm:%s213] %v232
                %v234 = vld [vmem:[%s220 + $0x18] sm:%s213]
                %235 = vst [vmem:[%s221 + $0x18] sm:%s213] %v234
                %v236 = vld [vmem:[%s220 + $0x1c] sm:%s213]
                %237 = vst [vmem:[%s221 + $0x1c] sm:%s213] %v236
                %v238 = vld [vmem:[%s220 + $0x20] sm:%s213]
                %239 = vst [vmem:[%s221 + $0x20] sm:%s213] %v238
                %v240 = vld [vmem:[%s220 + $0x24] sm:%s213]
                %241 = vst [vmem:[%s221 + $0x24] sm:%s213] %v240
                %v242 = vld [vmem:[%s220 + $0x28] sm:%s213]
                %243 = vst [vmem:[%s221 + $0x28] sm:%s213] %v242
                %v244 = vld [vmem:[%s220 + $0x2c] sm:%s213]
                %245 = vst [vmem:[%s221 + $0x2c] sm:%s213] %v244
                %v246 = vld [vmem:[%s220 + $0x30] sm:%s213]
                %247 = vst [vmem:[%s221 + $0x30] sm:%s213] %v246
                %v248 = vld [vmem:[%s220 + $0x34] sm:%s213]
                %249 = vst [vmem:[%s221 + $0x34] sm:%s213] %v248
                %v250 = vld [vmem:[%s220 + $0x38] sm:%s213]
                %251 = vst [vmem:[%s221 + $0x38] sm:%s213] %v250
                %v252 = vld [vmem:[%s220 + $0x3c] sm:%s213]
                %253 = vst [vmem:[%s221 + $0x3c] sm:%s213] %v252
                %v254 = vld [vmem:[%s220 + $0x40] sm:%s213]
                %255 = vst [vmem:[%s221 + $0x40] sm:%s213] %v254
                %v256 = vld [vmem:[%s220 + $0x44] sm:%s213]
                %257 = vst [vmem:[%s221 + $0x44] sm:%s213] %v256
                %v258 = vld [vmem:[%s220 + $0x48] sm:%s213]
                %259 = vst [vmem:[%s221 + $0x48] sm:%s213] %v258
                %v260 = vld [vmem:[%s220 + $0x4c] sm:%s213]
                %261 = vst [vmem:[%s221 + $0x4c] sm:%s213] %v260
                %v262 = vld [vmem:[%s220 + $0x50] sm:%s213]
                %263 = vst [vmem:[%s221 + $0x50] sm:%s213] %v262
                %v264 = vld [vmem:[%s220 + $0x54] sm:%s213]
                %265 = vst [vmem:[%s221 + $0x54] sm:%s213] %v264
                %v266 = vld [vmem:[%s220 + $0x58] sm:%s213]
                %267 = vst [vmem:[%s221 + $0x58] sm:%s213] %v266
                %v268 = vld [vmem:[%s220 + $0x5c] sm:%s213]
                %269 = vst [vmem:[%s221 + $0x5c] sm:%s213] %v268
                %v270 = vld [vmem:[%s220 + $0x60] sm:%s213]
                %271 = vst [vmem:[%s221 + $0x60] sm:%s213] %v270
                %v272 = vld [vmem:[%s220 + $0x64] sm:%s213]
                %273 = vst [vmem:[%s221 + $0x64] sm:%s213] %v272
                %v274 = vld [vmem:[%s220 + $0x68] sm:%s213]
                %275 = vst [vmem:[%s221 + $0x68] sm:%s213] %v274
                %v276 = vld [vmem:[%s220 + $0x6c] sm:%s213]
                %277 = vst [vmem:[%s221 + $0x6c] sm:%s213] %v276
                %v278 = vld [vmem:[%s220 + $0x70] sm:%s213]
                %279 = vst [vmem:[%s221 + $0x70] sm:%s213] %v278
                %v280 = vld [vmem:[%s220 + $0x74] sm:%s213]
                %281 = vst [vmem:[%s221 + $0x74] sm:%s213] %v280
                %v282 = vld [vmem:[%s220 + $0x78] sm:%s213]
                %283 = vst [vmem:[%s221 + $0x78] sm:%s213] %v282
                %v284 = vld [vmem:[%s220 + $0x7c] sm:%s213]
                %285 = vst [vmem:[%s221 + $0x7c] sm:%s213] %v284
                %v286 = vld [vmem:[%s220 + $0x200] sm:%s213]
                %287 = vst [vmem:[%s221 + $0x80] sm:%s213] %v286
                %v288 = vld [vmem:[%s220 + $0x204] sm:%s213]
                %289 = vst [vmem:[%s221 + $0x84] sm:%s213] %v288
                %v290 = vld [vmem:[%s220 + $0x208] sm:%s213]
                %291 = vst [vmem:[%s221 + $0x88] sm:%s213] %v290
                %v292 = vld [vmem:[%s220 + $0x20c] sm:%s213]
                %293 = vst [vmem:[%s221 + $0x8c] sm:%s213] %v292
                %v294 = vld [vmem:[%s220 + $0x210] sm:%s213]
                %295 = vst [vmem:[%s221 + $0x90] sm:%s213] %v294
                %v296 = vld [vmem:[%s220 + $0x214] sm:%s213]
                %297 = vst [vmem:[%s221 + $0x94] sm:%s213] %v296
                %v298 = vld [vmem:[%s220 + $0x218] sm:%s213]
                %299 = vst [vmem:[%s221 + $0x98] sm:%s213] %v298
                %v300 = vld [vmem:[%s220 + $0x21c] sm:%s213]
                %301 = vst [vmem:[%s221 + $0x9c] sm:%s213] %v300
                %v302 = vld [vmem:[%s220 + $0x220] sm:%s213]
                %303 = vst [vmem:[%s221 + $0xa0] sm:%s213] %v302
                %v304 = vld [vmem:[%s220 + $0x224] sm:%s213]
                %305 = vst [vmem:[%s221 + $0xa4] sm:%s213] %v304
                %v306 = vld [vmem:[%s220 + $0x228] sm:%s213]
                %307 = vst [vmem:[%s221 + $0xa8] sm:%s213] %v306
                %v308 = vld [vmem:[%s220 + $0x22c] sm:%s213]
                %309 = vst [vmem:[%s221 + $0xac] sm:%s213] %v308
                %v310 = vld [vmem:[%s220 + $0x230] sm:%s213]
                %311 = vst [vmem:[%s221 + $0xb0] sm:%s213] %v310
                %v312 = vld [vmem:[%s220 + $0x234] sm:%s213]
                %313 = vst [vmem:[%s221 + $0xb4] sm:%s213] %v312
                %v314 = vld [vmem:[%s220 + $0x238] sm:%s213]
                %315 = vst [vmem:[%s221 + $0xb8] sm:%s213] %v314
                %v316 = vld [vmem:[%s220 + $0x23c] sm:%s213]
                %317 = vst [vmem:[%s221 + $0xbc] sm:%s213] %v316
                %v318 = vld [vmem:[%s220 + $0x240] sm:%s213]
                %319 = vst [vmem:[%s221 + $0xc0] sm:%s213] %v318
                %v320 = vld [vmem:[%s220 + $0x244] sm:%s213]
                %321 = vst [vmem:[%s221 + $0xc4] sm:%s213] %v320
                %v322 = vld [vmem:[%s220 + $0x248] sm:%s213]
                %323 = vst [vmem:[%s221 + $0xc8] sm:%s213] %v322
                %v324 = vld [vmem:[%s220 + $0x24c] sm:%s213]
                %325 = vst [vmem:[%s221 + $0xcc] sm:%s213] %v324
                %v326 = vld [vmem:[%s220 + $0x250] sm:%s213]
                %327 = vst [vmem:[%s221 + $0xd0] sm:%s213] %v326
                %v328 = vld [vmem:[%s220 + $0x254] sm:%s213]
                %329 = vst [vmem:[%s221 + $0xd4] sm:%s213] %v328
                %v330 = vld [vmem:[%s220 + $0x258] sm:%s213]
                %331 = vst [vmem:[%s221 + $0xd8] sm:%s213] %v330
                %v332 = vld [vmem:[%s220 + $0x25c] sm:%s213]
                %333 = vst [vmem:[%s221 + $0xdc] sm:%s213] %v332
                %v334 = vld [vmem:[%s220 + $0x260] sm:%s213]
                %335 = vst [vmem:[%s221 + $0xe0] sm:%s213] %v334
                %v336 = vld [vmem:[%s220 + $0x264] sm:%s213]
                %337 = vst [vmem:[%s221 + $0xe4] sm:%s213] %v336
                %v338 = vld [vmem:[%s220 + $0x268] sm:%s213]
                %339 = vst [vmem:[%s221 + $0xe8] sm:%s213] %v338
                %v340 = vld [vmem:[%s220 + $0x26c] sm:%s213]
                %341 = vst [vmem:[%s221 + $0xec] sm:%s213] %v340
                %v342 = vld [vmem:[%s220 + $0x270] sm:%s213]
                %343 = vst [vmem:[%s221 + $0xf0] sm:%s213] %v342
                %v344 = vld [vmem:[%s220 + $0x274] sm:%s213]
                %345 = vst [vmem:[%s221 + $0xf4] sm:%s213] %v344
                %v346 = vld [vmem:[%s220 + $0x278] sm:%s213]
                %347 = vst [vmem:[%s221 + $0xf8] sm:%s213] %v346
                %v348 = vld [vmem:[%s220 + $0x27c] sm:%s213]
                %349 = vst [vmem:[%s221 + $0xfc] sm:%s213] %v348
                %v350 = vld [vmem:[%s220 + $0x400] sm:%s213]
                %351 = vst [vmem:[%s221 + $0x100] sm:%s213] %v350
                %v352 = vld [vmem:[%s220 + $0x404] sm:%s213]
                %353 = vst [vmem:[%s221 + $0x104] sm:%s213] %v352
                %v354 = vld [vmem:[%s220 + $0x408] sm:%s213]
                %355 = vst [vmem:[%s221 + $0x108] sm:%s213] %v354
                %v356 = vld [vmem:[%s220 + $0x40c] sm:%s213]
                %357 = vst [vmem:[%s221 + $0x10c] sm:%s213] %v356
                %v358 = vld [vmem:[%s220 + $0x410] sm:%s213]
                %359 = vst [vmem:[%s221 + $0x110] sm:%s213] %v358
                %v360 = vld [vmem:[%s220 + $0x414] sm:%s213]
                %361 = vst [vmem:[%s221 + $0x114] sm:%s213] %v360
                %v362 = vld [vmem:[%s220 + $0x418] sm:%s213]
                %363 = vst [vmem:[%s221 + $0x118] sm:%s213] %v362
                %v364 = vld [vmem:[%s220 + $0x41c] sm:%s213]
                %365 = vst [vmem:[%s221 + $0x11c] sm:%s213] %v364
                %v366 = vld [vmem:[%s220 + $0x420] sm:%s213]
                %367 = vst [vmem:[%s221 + $0x120] sm:%s213] %v366
                %v368 = vld [vmem:[%s220 + $0x424] sm:%s213]
                %369 = vst [vmem:[%s221 + $0x124] sm:%s213] %v368
                %v370 = vld [vmem:[%s220 + $0x428] sm:%s213]
                %371 = vst [vmem:[%s221 + $0x128] sm:%s213] %v370
                %v372 = vld [vmem:[%s220 + $0x42c] sm:%s213]
                %373 = vst [vmem:[%s221 + $0x12c] sm:%s213] %v372
                %v374 = vld [vmem:[%s220 + $0x430] sm:%s213]
                %375 = vst [vmem:[%s221 + $0x130] sm:%s213] %v374
                %v376 = vld [vmem:[%s220 + $0x434] sm:%s213]
                %377 = vst [vmem:[%s221 + $0x134] sm:%s213] %v376
                %v378 = vld [vmem:[%s220 + $0x438] sm:%s213]
                %379 = vst [vmem:[%s221 + $0x138] sm:%s213] %v378
                %v380 = vld [vmem:[%s220 + $0x43c] sm:%s213]
                %381 = vst [vmem:[%s221 + $0x13c] sm:%s213] %v380
                %v382 = vld [vmem:[%s220 + $0x440] sm:%s213]
                %383 = vst [vmem:[%s221 + $0x140] sm:%s213] %v382
                %v384 = vld [vmem:[%s220 + $0x444] sm:%s213]
                %385 = vst [vmem:[%s221 + $0x144] sm:%s213] %v384
                %v386 = vld [vmem:[%s220 + $0x448] sm:%s213]
                %387 = vst [vmem:[%s221 + $0x148] sm:%s213] %v386
                %v388 = vld [vmem:[%s220 + $0x44c] sm:%s213]
                %389 = vst [vmem:[%s221 + $0x14c] sm:%s213] %v388
                %v390 = vld [vmem:[%s220 + $0x450] sm:%s213]
                %391 = vst [vmem:[%s221 + $0x150] sm:%s213] %v390
                %v392 = vld [vmem:[%s220 + $0x454] sm:%s213]
                %393 = vst [vmem:[%s221 + $0x154] sm:%s213] %v392
                %v394 = vld [vmem:[%s220 + $0x458] sm:%s213]
                %395 = vst [vmem:[%s221 + $0x158] sm:%s213] %v394
                %v396 = vld [vmem:[%s220 + $0x45c] sm:%s213]
                %397 = vst [vmem:[%s221 + $0x15c] sm:%s213] %v396
                %v398 = vld [vmem:[%s220 + $0x460] sm:%s213]
                %399 = vst [vmem:[%s221 + $0x160] sm:%s213] %v398
                %v400 = vld [vmem:[%s220 + $0x464] sm:%s213]
                %401 = vst [vmem:[%s221 + $0x164] sm:%s213] %v400
                %v402 = vld [vmem:[%s220 + $0x468] sm:%s213]
                %403 = vst [vmem:[%s221 + $0x168] sm:%s213] %v402
                %v404 = vld [vmem:[%s220 + $0x46c] sm:%s213]
                %405 = vst [vmem:[%s221 + $0x16c] sm:%s213] %v404
                %v406 = vld [vmem:[%s220 + $0x470] sm:%s213]
                %407 = vst [vmem:[%s221 + $0x170] sm:%s213] %v406
                %v408 = vld [vmem:[%s220 + $0x474] sm:%s213]
                %409 = vst [vmem:[%s221 + $0x174] sm:%s213] %v408
                %v410 = vld [vmem:[%s220 + $0x478] sm:%s213]
                %411 = vst [vmem:[%s221 + $0x178] sm:%s213] %v410
                %v412 = vld [vmem:[%s220 + $0x47c] sm:%s213]
                %413 = vst [vmem:[%s221 + $0x17c] sm:%s213] %v412
              $region53: #{osg_decoder_forward.1} parent=47 // loop_footer
                %s219 = sadd.s32 1, %s215
              $region54: #{osg_decoder_forward.1} parent=47 // loop_footer_branch
                %214 = sbr.rel target = $region50
              $region55: #{osg_decoder_forward.1} parent=47 // loop_exit
                _
            $region48: #{osg_decoder_forward.1} parent=39 // pred_fallthru
              _
          $region40: #{osg_decoder_forward.1} parent=35 // pred_fallthru
            _
          %626 = vnop
        $region36: #{osg_decoder_forward.1} parent=31 // pred_fallthru
          _
      $region32: #{osg_decoder_forward.1} parent=5 // pred_fallthru
        _
      %p627 = scmp.le.s32.totalorder 1, %s11
      %p628 = scmp.lt.s32.totalorder %s11, 9
      %p629 = pnand %p627, %p628
      %p630 = pneg %p629
      // Predicated region
      $region74: #{osg_decoder_forward.1} parent=5 // pred_check
        _
      $region75: #{osg_decoder_forward.1} parent=5 // pred_check_branch
        %632 = sbr.rel (%p629) target = $region77
      $region76: #{osg_decoder_forward.1} parent=5 // pred_region
        %s633 = ssub.s32 %s11, 1
        %s634 = sand.u32 %s38, 1
        %s635 = sand.u32 %s38, 1
        %s636 = smul.addr %s635, 384
        %s637 = scalar_lea.vmem [#allocation2], %s636
        // Predicated region
        $region78: #{osg_decoder_forward.1} parent=76 // pred_check
          %p638 = pneg %p51
        $region79: #{osg_decoder_forward.1} parent=76 // pred_check_branch
          %640 = sbr.rel (%p638) target = $region81
        $region80: #{osg_decoder_forward.1} parent=76 // pred_region
          _
        $region81: #{osg_decoder_forward.1} parent=76 // pred_fallthru
          _
        %s641 = sand.u32 %s38, 1
        %s642 = sand.u32 %s38, 1
        %s643 = smul.addr %s642, 384
        %s644 = scalar_lea.vmem [#allocation2], %s643
        %p645 = pneg %p51
        %p646 = pneg %p48
        %p647 = pneg %p72
        %p648 = pneg %p69
        %p649 = pneg %p93
        %p650 = pneg %p90
        %p651 = pneg %p114
        %p652 = pneg %p111
        %p653 = pneg %p135
        %p654 = pneg %p132
        %p655 = pneg %p163
        %p656 = pneg %p160
        %s657 = smul.u32 32, %s21
        %p658 = scmp.lt.s32.totalorder %s20, 1
        %s659 = scalar_select %p658, %s20, 1
        %p660 = scmp.lt.s32.totalorder %s657, 127
        %s661 = scalar_select %p660, %s657, 127
        %s662 = smul.addr %s659, 128
        %s663 = sadd.s32 %s661, %s662
        %s664 = smul.addr %s663, 8
        %s665 = scalar_lea.vmem %s5, %s664
        %s666 = smul.u32 32, %s21
        %s667 = smul.u32 32, %s21
        %p668 = scmp.lt.s32.totalorder %s20, 1
        %s669 = scalar_select %p668, %s20, 1
        %p670 = scmp.lt.s32.totalorder %s667, 127
        %s671 = scalar_select %p670, %s667, 127
        %s672 = smul.addr %s669, 128
        %s673 = sadd.s32 %s671, %s672
        %s674 = smul.addr %s673, 8
        %s675 = scalar_lea.vmem %s5, %s674
        %s676 = smul.u32 32, %s21
        %v678 = vld [vmem:[%s1] sm:$0xf]
        %v679 = vld [vmem:[%s1 + $0x4] sm:$0xf]
        %v680 = vld [vmem:[%s1 + $0x8] sm:$0xf]
        %v681 = vld [vmem:[%s1 + $0xc] sm:$0xf]
        %v682 = vld [vmem:[%s637] sm:$0xf]
        %v683 = vld [vmem:[%s637 + $0x4] sm:$0xf]
        %v684 = vld [vmem:[%s637 + $0x8] sm:$0xf]
        %v685 = vld [vmem:[%s637 + $0xc] sm:$0xf]
        %v686 = vld [vmem:[%s637 + $0x10] sm:$0xf]
        %v687 = vld [vmem:[%s637 + $0x14] sm:$0xf]
        %v688 = vld [vmem:[%s637 + $0x18] sm:$0xf]
        %v689 = vld [vmem:[%s637 + $0x1c] sm:$0xf]
        %v690 = vld [vmem:[%s637 + $0x20] sm:$0xf]
        %v691 = vld [vmem:[%s637 + $0x24] sm:$0xf]
        %v692 = vld [vmem:[%s637 + $0x28] sm:$0xf]
        %v693 = vld [vmem:[%s637 + $0x2c] sm:$0xf]
        %v694 = vld [vmem:[%s637 + $0x30] sm:$0xf]
        %v695 = vld [vmem:[%s637 + $0x34] sm:$0xf]
        %v696 = vld [vmem:[%s637 + $0x38] sm:$0xf]
        %v697 = vld [vmem:[%s637 + $0x3c] sm:$0xf]
        %v698 = vld [vmem:[%s637 + $0x40] sm:$0xf]
        %v699 = vld [vmem:[%s637 + $0x44] sm:$0xf]
        %v700 = vld [vmem:[%s637 + $0x48] sm:$0xf]
        %v701 = vld [vmem:[%s637 + $0x4c] sm:$0xf]
        %v702 = vld [vmem:[%s637 + $0x50] sm:$0xf]
        %v703 = vld [vmem:[%s637 + $0x54] sm:$0xf]
        %v704 = vld [vmem:[%s637 + $0x58] sm:$0xf]
        %v705 = vld [vmem:[%s637 + $0x5c] sm:$0xf]
        %v706 = vld [vmem:[%s637 + $0x60] sm:$0xf]
        %v707 = vld [vmem:[%s637 + $0x64] sm:$0xf]
        %v708 = vld [vmem:[%s637 + $0x68] sm:$0xf]
        %v709 = vld [vmem:[%s637 + $0x6c] sm:$0xf]
        %v710 = vld [vmem:[%s637 + $0x70] sm:$0xf]
        %v711 = vld [vmem:[%s637 + $0x74] sm:$0xf]
        %v712 = vld [vmem:[%s637 + $0x78] sm:$0xf]
        %v713 = vld [vmem:[%s637 + $0x7c] sm:$0xf]
        %s714 = scalar_lea.vmem %s637, 128 [#allocation2]
        %v715 = vld [vmem:[%s714] sm:$0xf]
        %v716 = vld [vmem:[%s714 + $0x4] sm:$0xf]
        %v717 = vld [vmem:[%s714 + $0x8] sm:$0xf]
        %v718 = vld [vmem:[%s714 + $0xc] sm:$0xf]
        %v719 = vld [vmem:[%s714 + $0x10] sm:$0xf]
        %v720 = vld [vmem:[%s714 + $0x14] sm:$0xf]
        %v721 = vld [vmem:[%s714 + $0x18] sm:$0xf]
        %v722 = vld [vmem:[%s714 + $0x1c] sm:$0xf]
        %v723 = vld [vmem:[%s714 + $0x20] sm:$0xf]
        %v724 = vld [vmem:[%s714 + $0x24] sm:$0xf]
        %v725 = vld [vmem:[%s714 + $0x28] sm:$0xf]
        %v726 = vld [vmem:[%s714 + $0x2c] sm:$0xf]
        %v727 = vld [vmem:[%s714 + $0x30] sm:$0xf]
        %v728 = vld [vmem:[%s714 + $0x34] sm:$0xf]
        %v729 = vld [vmem:[%s714 + $0x38] sm:$0xf]
        %v730 = vld [vmem:[%s714 + $0x3c] sm:$0xf]
        %v731 = vld [vmem:[%s714 + $0x40] sm:$0xf]
        %v732 = vld [vmem:[%s714 + $0x44] sm:$0xf]
        %v733 = vld [vmem:[%s714 + $0x48] sm:$0xf]
        %v734 = vld [vmem:[%s714 + $0x4c] sm:$0xf]
        %v735 = vld [vmem:[%s714 + $0x50] sm:$0xf]
        %v736 = vld [vmem:[%s714 + $0x54] sm:$0xf]
        %v737 = vld [vmem:[%s714 + $0x58] sm:$0xf]
        %v738 = vld [vmem:[%s714 + $0x5c] sm:$0xf]
        %v739 = vld [vmem:[%s714 + $0x60] sm:$0xf]
        %v740 = vld [vmem:[%s714 + $0x64] sm:$0xf]
        %v741 = vld [vmem:[%s714 + $0x68] sm:$0xf]
        %v742 = vld [vmem:[%s714 + $0x6c] sm:$0xf]
        %v743 = vld [vmem:[%s714 + $0x70] sm:$0xf]
        %v744 = vld [vmem:[%s714 + $0x74] sm:$0xf]
        %v745 = vld [vmem:[%s714 + $0x78] sm:$0xf]
        %v746 = vld [vmem:[%s714 + $0x7c] sm:$0xf]
        %v779 = vunpack.c.l.b16 %v715
        %v780 = vunpack.c.l.b16 %v716
        %v781 = vunpack.c.l.b16 %v717
        %v782 = vunpack.c.l.b16 %v718
        %v783 = vunpack.c.l.b16 %v719
        %v784 = vunpack.c.l.b16 %v720
        %v785 = vunpack.c.l.b16 %v721
        %v786 = vunpack.c.l.b16 %v722
        %v787 = vunpack.c.l.b16 %v723
        %v788 = vunpack.c.l.b16 %v724
        %v789 = vunpack.c.l.b16 %v725
        %v790 = vunpack.c.l.b16 %v726
        %v791 = vunpack.c.l.b16 %v727
        %v792 = vunpack.c.l.b16 %v728
        %v793 = vunpack.c.l.b16 %v729
        %v794 = vunpack.c.l.b16 %v730
        %v795 = vunpack.c.l.b16 %v731
        %v796 = vunpack.c.l.b16 %v732
        %v797 = vunpack.c.l.b16 %v733
        %v798 = vunpack.c.l.b16 %v734
        %v799 = vunpack.c.l.b16 %v735
        %v800 = vunpack.c.l.b16 %v736
        %v801 = vunpack.c.l.b16 %v737
        %v802 = vunpack.c.l.b16 %v738
        %v803 = vunpack.c.l.b16 %v739
        %v804 = vunpack.c.l.b16 %v740
        %v805 = vunpack.c.l.b16 %v741
        %v806 = vunpack.c.l.b16 %v742
        %v807 = vunpack.c.l.b16 %v743
        %v808 = vunpack.c.l.b16 %v744
        %v809 = vunpack.c.l.b16 %v745
        %v810 = vunpack.c.l.b16 %v746
        %v811 = vpack.c.b16 %v780, %v779
        %v812 = vpack.c.b16 %v782, %v781
        %v813 = vpack.c.b16 %v784, %v783
        %v814 = vpack.c.b16 %v786, %v785
        %v815 = vpack.c.b16 %v788, %v787
        %v816 = vpack.c.b16 %v790, %v789
        %v817 = vpack.c.b16 %v792, %v791
        %v818 = vpack.c.b16 %v794, %v793
        %v819 = vpack.c.b16 %v796, %v795
        %v820 = vpack.c.b16 %v798, %v797
        %v821 = vpack.c.b16 %v800, %v799
        %v822 = vpack.c.b16 %v802, %v801
        %v823 = vpack.c.b16 %v804, %v803
        %v824 = vpack.c.b16 %v806, %v805
        %v825 = vpack.c.b16 %v808, %v807
        %v826 = vpack.c.b16 %v810, %v809
        %v831 = vunpack.c.l.b16 %v678
        %v832 = vunpack.c.l.b16 %v679
        %v833 = vunpack.c.l.b16 %v680
        %v834 = vunpack.c.l.b16 %v681
        %v835 = vpack.c.b16 %v832, %v831
        %v836 = vpack.c.b16 %v834, %v833
        %vm839 = vcmask 261120
        %v841 = vsel %vm839, %v811, 0
        %v844 = vsel %vm839, %v812, 0
        %v847 = vsel %vm839, %v813, 0
        %v850 = vsel %vm839, %v814, 0
        %v853 = vsel %vm839, %v815, 0
        %v856 = vsel %vm839, %v816, 0
        %v859 = vsel %vm839, %v817, 0
        %v862 = vsel %vm839, %v818, 0
        %v865 = vsel %vm839, %v819, 0
        %v868 = vsel %vm839, %v820, 0
        %v871 = vsel %vm839, %v821, 0
        %v874 = vsel %vm839, %v822, 0
        %v877 = vsel %vm839, %v823, 0
        %v880 = vsel %vm839, %v824, 0
        %v883 = vsel %vm839, %v825, 0
        %v886 = vsel %vm839, %v826, 0
        %888 = vmatpush.bf16.msra.mxu0 0
        %889 = vmatpush.bf16.msra.mxu0 0
        %890 = vmatpush.bf16.msra.mxu0 0
        %891 = vmatpush.bf16.msra.mxu0 0
        %892 = vmatpush.bf16.msra.mxu0 0
        %893 = vmatpush.bf16.msra.mxu0 0
        %894 = vmatpush.bf16.msra.mxu0 %v836
        %895 = vmatpush.bf16.msra.mxu0 %v835
        %896 = vmatmul.bf16.gmra.mxu0 %v841
        %v897 = vpop.f32.mrf.mxu0
        %v898 = vadd.f32 0.0, %v897
        %v899 = vpop.f32.mrf.mxu0
        %v900 = vadd.f32 0.0, %v899
        %901 = vmatmul.bf16.gmra.mxu0 %v844
        %v902 = vpop.f32.mrf.mxu0
        %v903 = vadd.f32 0.0, %v902
        %v904 = vpop.f32.mrf.mxu0
        %v905 = vadd.f32 0.0, %v904
        %906 = vmatmul.bf16.gmra.mxu0 %v847
        %v907 = vpop.f32.mrf.mxu0
        %v908 = vadd.f32 0.0, %v907
        %v909 = vpop.f32.mrf.mxu0
        %v910 = vadd.f32 0.0, %v909
        %911 = vmatmul.bf16.gmra.mxu0 %v850
        %v912 = vpop.f32.mrf.mxu0
        %v913 = vadd.f32 0.0, %v912
        %v914 = vpop.f32.mrf.mxu0
        %v915 = vadd.f32 0.0, %v914
        %916 = vmatmul.bf16.gmra.mxu0 %v853
        %v917 = vpop.f32.mrf.mxu0
        %v918 = vadd.f32 0.0, %v917
        %v919 = vpop.f32.mrf.mxu0
        %v920 = vadd.f32 0.0, %v919
        %921 = vmatmul.bf16.gmra.mxu0 %v856
        %v922 = vpop.f32.mrf.mxu0
        %v923 = vadd.f32 0.0, %v922
        %v924 = vpop.f32.mrf.mxu0
        %v925 = vadd.f32 0.0, %v924
        %926 = vmatmul.bf16.gmra.mxu0 %v859
        %v927 = vpop.f32.mrf.mxu0
        %v928 = vadd.f32 0.0, %v927
        %v929 = vpop.f32.mrf.mxu0
        %v930 = vadd.f32 0.0, %v929
        %931 = vmatmul.bf16.gmra.mxu0 %v862
        %v932 = vpop.f32.mrf.mxu0
        %v933 = vadd.f32 0.0, %v932
        %v934 = vpop.f32.mrf.mxu0
        %v935 = vadd.f32 0.0, %v934
        %936 = vmatmul.bf16.gmra.mxu0 %v865
        %v937 = vpop.f32.mrf.mxu0
        %v938 = vadd.f32 0.0, %v937
        %v939 = vpop.f32.mrf.mxu0
        %v940 = vadd.f32 0.0, %v939
        %941 = vmatmul.bf16.gmra.mxu0 %v868
        %v942 = vpop.f32.mrf.mxu0
        %v943 = vadd.f32 0.0, %v942
        %v944 = vpop.f32.mrf.mxu0
        %v945 = vadd.f32 0.0, %v944
        %946 = vmatmul.bf16.gmra.mxu0 %v871
        %v947 = vpop.f32.mrf.mxu0
        %v948 = vadd.f32 0.0, %v947
        %v949 = vpop.f32.mrf.mxu0
        %v950 = vadd.f32 0.0, %v949
        %951 = vmatmul.bf16.gmra.mxu0 %v874
        %v952 = vpop.f32.mrf.mxu0
        %v953 = vadd.f32 0.0, %v952
        %v954 = vpop.f32.mrf.mxu0
        %v955 = vadd.f32 0.0, %v954
        %956 = vmatmul.bf16.gmra.mxu0 %v877
        %v957 = vpop.f32.mrf.mxu0
        %v958 = vadd.f32 0.0, %v957
        %v959 = vpop.f32.mrf.mxu0
        %v960 = vadd.f32 0.0, %v959
        %961 = vmatmul.bf16.gmra.mxu0 %v880
        %v962 = vpop.f32.mrf.mxu0
        %v963 = vadd.f32 0.0, %v962
        %v964 = vpop.f32.mrf.mxu0
        %v965 = vadd.f32 0.0, %v964
        %966 = vmatmul.bf16.gmra.mxu0 %v883
        %v967 = vpop.f32.mrf.mxu0
        %v968 = vadd.f32 0.0, %v967
        %v969 = vpop.f32.mrf.mxu0
        %v970 = vadd.f32 0.0, %v969
        %971 = vmatmul.bf16.gmra.mxu0 %v886
        %v972 = vpop.f32.mrf.mxu0
        %v973 = vadd.f32 0.0, %v972
        %v974 = vpop.f32.mrf.mxu0
        %v975 = vadd.f32 0.0, %v974
        %976 = vdwg.mxu0
        %v1009 = vunpack.c.l.b16 %v682
        %v1010 = vunpack.c.l.b16 %v683
        %v1011 = vunpack.c.l.b16 %v684
        %v1012 = vunpack.c.l.b16 %v685
        %v1013 = vunpack.c.l.b16 %v686
        %v1014 = vunpack.c.l.b16 %v687
        %v1015 = vunpack.c.l.b16 %v688
        %v1016 = vunpack.c.l.b16 %v689
        %v1017 = vunpack.c.l.b16 %v690
        %v1018 = vunpack.c.l.b16 %v691
        %v1019 = vunpack.c.l.b16 %v692
        %v1020 = vunpack.c.l.b16 %v693
        %v1021 = vunpack.c.l.b16 %v694
        %v1022 = vunpack.c.l.b16 %v695
        %v1023 = vunpack.c.l.b16 %v696
        %v1024 = vunpack.c.l.b16 %v697
        %v1025 = vunpack.c.l.b16 %v698
        %v1026 = vunpack.c.l.b16 %v699
        %v1027 = vunpack.c.l.b16 %v700
        %v1028 = vunpack.c.l.b16 %v701
        %v1029 = vunpack.c.l.b16 %v702
        %v1030 = vunpack.c.l.b16 %v703
        %v1031 = vunpack.c.l.b16 %v704
        %v1032 = vunpack.c.l.b16 %v705
        %v1033 = vunpack.c.l.b16 %v706
        %v1034 = vunpack.c.l.b16 %v707
        %v1035 = vunpack.c.l.b16 %v708
        %v1036 = vunpack.c.l.b16 %v709
        %v1037 = vunpack.c.l.b16 %v710
        %v1038 = vunpack.c.l.b16 %v711
        %v1039 = vunpack.c.l.b16 %v712
        %v1040 = vunpack.c.l.b16 %v713
        %v1041 = vpack.c.b16 %v1010, %v1009
        %v1042 = vpack.c.b16 %v1012, %v1011
        %v1043 = vpack.c.b16 %v1014, %v1013
        %v1044 = vpack.c.b16 %v1016, %v1015
        %v1045 = vpack.c.b16 %v1018, %v1017
        %v1046 = vpack.c.b16 %v1020, %v1019
        %v1047 = vpack.c.b16 %v1022, %v1021
        %v1048 = vpack.c.b16 %v1024, %v1023
        %v1049 = vpack.c.b16 %v1026, %v1025
        %v1050 = vpack.c.b16 %v1028, %v1027
        %v1051 = vpack.c.b16 %v1030, %v1029
        %v1052 = vpack.c.b16 %v1032, %v1031
        %v1053 = vpack.c.b16 %v1034, %v1033
        %v1054 = vpack.c.b16 %v1036, %v1035
        %v1055 = vpack.c.b16 %v1038, %v1037
        %v1056 = vpack.c.b16 %v1040, %v1039
        %v1058 = vsel %vm839, %v1041, 0
        %v1061 = vsel %vm839, %v1042, 0
        %v1064 = vsel %vm839, %v1043, 0
        %v1067 = vsel %vm839, %v1044, 0
        %v1070 = vsel %vm839, %v1045, 0
        %v1073 = vsel %vm839, %v1046, 0
        %v1076 = vsel %vm839, %v1047, 0
        %v1079 = vsel %vm839, %v1048, 0
        %v1082 = vsel %vm839, %v1049, 0
        %v1085 = vsel %vm839, %v1050, 0
        %v1088 = vsel %vm839, %v1051, 0
        %v1091 = vsel %vm839, %v1052, 0
        %v1094 = vsel %vm839, %v1053, 0
        %v1097 = vsel %vm839, %v1054, 0
        %v1100 = vsel %vm839, %v1055, 0
        %v1103 = vsel %vm839, %v1056, 0
        %1105 = vmatpush.bf16.msra.mxu0 0
        %1106 = vmatpush.bf16.msra.mxu0 0
        %1107 = vmatpush.bf16.msra.mxu0 0
        %1108 = vmatpush.bf16.msra.mxu0 0
        %1109 = vmatpush.bf16.msra.mxu0 0
        %1110 = vmatpush.bf16.msra.mxu0 0
        %1111 = vmatpush.bf16.msra.mxu0 %v836
        %1112 = vmatpush.bf16.msra.mxu0 %v835
        %1113 = vmatmul.bf16.gmra.mxu0 %v1058
        %v1114 = vpop.f32.mrf.mxu0
        %v1115 = vadd.f32 %v898, %v1114
        %v1116 = vpop.f32.mrf.mxu0
        %v1117 = vadd.f32 %v900, %v1116
        %1118 = vmatmul.bf16.gmra.mxu0 %v1061
        %v1119 = vpop.f32.mrf.mxu0
        %v1120 = vadd.f32 %v903, %v1119
        %v1121 = vpop.f32.mrf.mxu0
        %v1122 = vadd.f32 %v905, %v1121
        %1123 = vmatmul.bf16.gmra.mxu0 %v1064
        %v1124 = vpop.f32.mrf.mxu0
        %v1125 = vadd.f32 %v908, %v1124
        %v1126 = vpop.f32.mrf.mxu0
        %v1127 = vadd.f32 %v910, %v1126
        %1128 = vmatmul.bf16.gmra.mxu0 %v1067
        %v1129 = vpop.f32.mrf.mxu0
        %v1130 = vadd.f32 %v913, %v1129
        %v1131 = vpop.f32.mrf.mxu0
        %v1132 = vadd.f32 %v915, %v1131
        %1133 = vmatmul.bf16.gmra.mxu0 %v1070
        %v1134 = vpop.f32.mrf.mxu0
        %v1135 = vadd.f32 %v918, %v1134
        %v1136 = vpop.f32.mrf.mxu0
        %v1137 = vadd.f32 %v920, %v1136
        %1138 = vmatmul.bf16.gmra.mxu0 %v1073
        %v1139 = vpop.f32.mrf.mxu0
        %v1140 = vadd.f32 %v923, %v1139
        %v1141 = vpop.f32.mrf.mxu0
        %v1142 = vadd.f32 %v925, %v1141
        %1143 = vmatmul.bf16.gmra.mxu0 %v1076
        %v1144 = vpop.f32.mrf.mxu0
        %v1145 = vadd.f32 %v928, %v1144
        %v1146 = vpop.f32.mrf.mxu0
        %v1147 = vadd.f32 %v930, %v1146
        %1148 = vmatmul.bf16.gmra.mxu0 %v1079
        %v1149 = vpop.f32.mrf.mxu0
        %v1150 = vadd.f32 %v933, %v1149
        %v1151 = vpop.f32.mrf.mxu0
        %v1152 = vadd.f32 %v935, %v1151
        %1153 = vmatmul.bf16.gmra.mxu0 %v1082
        %v1154 = vpop.f32.mrf.mxu0
        %v1155 = vadd.f32 %v938, %v1154
        %v1156 = vpop.f32.mrf.mxu0
        %v1157 = vadd.f32 %v940, %v1156
        %1158 = vmatmul.bf16.gmra.mxu0 %v1085
        %v1159 = vpop.f32.mrf.mxu0
        %v1160 = vadd.f32 %v943, %v1159
        %v1161 = vpop.f32.mrf.mxu0
        %v1162 = vadd.f32 %v945, %v1161
        %1163 = vmatmul.bf16.gmra.mxu0 %v1088
        %v1164 = vpop.f32.mrf.mxu0
        %v1165 = vadd.f32 %v948, %v1164
        %v1166 = vpop.f32.mrf.mxu0
        %v1167 = vadd.f32 %v950, %v1166
        %1168 = vmatmul.bf16.gmra.mxu0 %v1091
        %v1169 = vpop.f32.mrf.mxu0
        %v1170 = vadd.f32 %v953, %v1169
        %v1171 = vpop.f32.mrf.mxu0
        %v1172 = vadd.f32 %v955, %v1171
        %1173 = vmatmul.bf16.gmra.mxu0 %v1094
        %v1174 = vpop.f32.mrf.mxu0
        %v1175 = vadd.f32 %v958, %v1174
        %v1176 = vpop.f32.mrf.mxu0
        %v1177 = vadd.f32 %v960, %v1176
        %1178 = vmatmul.bf16.gmra.mxu0 %v1097
        %v1179 = vpop.f32.mrf.mxu0
        %v1180 = vadd.f32 %v963, %v1179
        %v1181 = vpop.f32.mrf.mxu0
        %v1182 = vadd.f32 %v965, %v1181
        %1183 = vmatmul.bf16.gmra.mxu0 %v1100
        %v1184 = vpop.f32.mrf.mxu0
        %v1185 = vadd.f32 %v968, %v1184
        %v1186 = vpop.f32.mrf.mxu0
        %v1187 = vadd.f32 %v970, %v1186
        %1188 = vmatmul.bf16.gmra.mxu0 %v1103
        %v1189 = vpop.f32.mrf.mxu0
        %v1190 = vadd.f32 %v973, %v1189
        %v1191 = vpop.f32.mrf.mxu0
        %v1192 = vadd.f32 %v975, %v1191
        %1193 = vdwg.mxu0
        %s1194 = scalar_lea.vmem %s637, 256 [#allocation2]
        %v1195 = vld [vmem:[%s1194] sm:$0xf]
        %v1196 = vld [vmem:[%s1194 + $0x4] sm:$0xf]
        %v1197 = vld [vmem:[%s1194 + $0x8] sm:$0xf]
        %v1198 = vld [vmem:[%s1194 + $0xc] sm:$0xf]
        %v1199 = vld [vmem:[%s1194 + $0x10] sm:$0xf]
        %v1200 = vld [vmem:[%s1194 + $0x14] sm:$0xf]
        %v1201 = vld [vmem:[%s1194 + $0x18] sm:$0xf]
        %v1202 = vld [vmem:[%s1194 + $0x1c] sm:$0xf]
        %v1203 = vld [vmem:[%s1194 + $0x20] sm:$0xf]
        %v1204 = vld [vmem:[%s1194 + $0x24] sm:$0xf]
        %v1205 = vld [vmem:[%s1194 + $0x28] sm:$0xf]
        %v1206 = vld [vmem:[%s1194 + $0x2c] sm:$0xf]
        %v1207 = vld [vmem:[%s1194 + $0x30] sm:$0xf]
        %v1208 = vld [vmem:[%s1194 + $0x34] sm:$0xf]
        %v1209 = vld [vmem:[%s1194 + $0x38] sm:$0xf]
        %v1210 = vld [vmem:[%s1194 + $0x3c] sm:$0xf]
        %v1211 = vld [vmem:[%s1194 + $0x40] sm:$0xf]
        %v1212 = vld [vmem:[%s1194 + $0x44] sm:$0xf]
        %v1213 = vld [vmem:[%s1194 + $0x48] sm:$0xf]
        %v1214 = vld [vmem:[%s1194 + $0x4c] sm:$0xf]
        %v1215 = vld [vmem:[%s1194 + $0x50] sm:$0xf]
        %v1216 = vld [vmem:[%s1194 + $0x54] sm:$0xf]
        %v1217 = vld [vmem:[%s1194 + $0x58] sm:$0xf]
        %v1218 = vld [vmem:[%s1194 + $0x5c] sm:$0xf]
        %v1219 = vld [vmem:[%s1194 + $0x60] sm:$0xf]
        %v1220 = vld [vmem:[%s1194 + $0x64] sm:$0xf]
        %v1221 = vld [vmem:[%s1194 + $0x68] sm:$0xf]
        %v1222 = vld [vmem:[%s1194 + $0x6c] sm:$0xf]
        %v1223 = vld [vmem:[%s1194 + $0x70] sm:$0xf]
        %v1224 = vld [vmem:[%s1194 + $0x74] sm:$0xf]
        %v1225 = vld [vmem:[%s1194 + $0x78] sm:$0xf]
        %v1226 = vld [vmem:[%s1194 + $0x7c] sm:$0xf]
        %v1259 = vunpack.c.l.b16 %v1195
        %v1260 = vunpack.c.l.b16 %v1196
        %v1261 = vunpack.c.l.b16 %v1197
        %v1262 = vunpack.c.l.b16 %v1198
        %v1263 = vunpack.c.l.b16 %v1199
        %v1264 = vunpack.c.l.b16 %v1200
        %v1265 = vunpack.c.l.b16 %v1201
        %v1266 = vunpack.c.l.b16 %v1202
        %v1267 = vunpack.c.l.b16 %v1203
        %v1268 = vunpack.c.l.b16 %v1204
        %v1269 = vunpack.c.l.b16 %v1205
        %v1270 = vunpack.c.l.b16 %v1206
        %v1271 = vunpack.c.l.b16 %v1207
        %v1272 = vunpack.c.l.b16 %v1208
        %v1273 = vunpack.c.l.b16 %v1209
        %v1274 = vunpack.c.l.b16 %v1210
        %v1275 = vunpack.c.l.b16 %v1211
        %v1276 = vunpack.c.l.b16 %v1212
        %v1277 = vunpack.c.l.b16 %v1213
        %v1278 = vunpack.c.l.b16 %v1214
        %v1279 = vunpack.c.l.b16 %v1215
        %v1280 = vunpack.c.l.b16 %v1216
        %v1281 = vunpack.c.l.b16 %v1217
        %v1282 = vunpack.c.l.b16 %v1218
        %v1283 = vunpack.c.l.b16 %v1219
        %v1284 = vunpack.c.l.b16 %v1220
        %v1285 = vunpack.c.l.b16 %v1221
        %v1286 = vunpack.c.l.b16 %v1222
        %v1287 = vunpack.c.l.b16 %v1223
        %v1288 = vunpack.c.l.b16 %v1224
        %v1289 = vunpack.c.l.b16 %v1225
        %v1290 = vunpack.c.l.b16 %v1226
        %v1291 = vpack.c.b16 %v1260, %v1259
        %v1292 = vpack.c.b16 %v1262, %v1261
        %v1293 = vpack.c.b16 %v1264, %v1263
        %v1294 = vpack.c.b16 %v1266, %v1265
        %v1295 = vpack.c.b16 %v1268, %v1267
        %v1296 = vpack.c.b16 %v1270, %v1269
        %v1297 = vpack.c.b16 %v1272, %v1271
        %v1298 = vpack.c.b16 %v1274, %v1273
        %v1299 = vpack.c.b16 %v1276, %v1275
        %v1300 = vpack.c.b16 %v1278, %v1277
        %v1301 = vpack.c.b16 %v1280, %v1279
        %v1302 = vpack.c.b16 %v1282, %v1281
        %v1303 = vpack.c.b16 %v1284, %v1283
        %v1304 = vpack.c.b16 %v1286, %v1285
        %v1305 = vpack.c.b16 %v1288, %v1287
        %v1306 = vpack.c.b16 %v1290, %v1289
        %v1308 = vsel %vm839, %v1291, 0
        %v1311 = vsel %vm839, %v1292, 0
        %v1314 = vsel %vm839, %v1293, 0
        %v1317 = vsel %vm839, %v1294, 0
        %v1320 = vsel %vm839, %v1295, 0
        %v1323 = vsel %vm839, %v1296, 0
        %v1326 = vsel %vm839, %v1297, 0
        %v1329 = vsel %vm839, %v1298, 0
        %v1332 = vsel %vm839, %v1299, 0
        %v1335 = vsel %vm839, %v1300, 0
        %v1338 = vsel %vm839, %v1301, 0
        %v1341 = vsel %vm839, %v1302, 0
        %v1344 = vsel %vm839, %v1303, 0
        %v1347 = vsel %vm839, %v1304, 0
        %v1350 = vsel %vm839, %v1305, 0
        %v1353 = vsel %vm839, %v1306, 0
        %1355 = vmatpush.bf16.msra.mxu0 0
        %1356 = vmatpush.bf16.msra.mxu0 0
        %1357 = vmatpush.bf16.msra.mxu0 0
        %1358 = vmatpush.bf16.msra.mxu0 0
        %1359 = vmatpush.bf16.msra.mxu0 0
        %1360 = vmatpush.bf16.msra.mxu0 0
        %1361 = vmatpush.bf16.msra.mxu0 %v836
        %1362 = vmatpush.bf16.msra.mxu0 %v835
        %1363 = vmatmul.bf16.gmra.mxu0 %v1308
        %v1364 = vpop.f32.mrf.mxu0
        %v1365 = vadd.f32 0.0, %v1364
        %v1366 = vpop.f32.mrf.mxu0
        %v1367 = vadd.f32 0.0, %v1366
        %1368 = vmatmul.bf16.gmra.mxu0 %v1311
        %v1369 = vpop.f32.mrf.mxu0
        %v1370 = vadd.f32 0.0, %v1369
        %v1371 = vpop.f32.mrf.mxu0
        %v1372 = vadd.f32 0.0, %v1371
        %1373 = vmatmul.bf16.gmra.mxu0 %v1314
        %v1374 = vpop.f32.mrf.mxu0
        %v1375 = vadd.f32 0.0, %v1374
        %v1376 = vpop.f32.mrf.mxu0
        %v1377 = vadd.f32 0.0, %v1376
        %1378 = vmatmul.bf16.gmra.mxu0 %v1317
        %v1379 = vpop.f32.mrf.mxu0
        %v1380 = vadd.f32 0.0, %v1379
        %v1381 = vpop.f32.mrf.mxu0
        %v1382 = vadd.f32 0.0, %v1381
        %1383 = vmatmul.bf16.gmra.mxu0 %v1320
        %v1384 = vpop.f32.mrf.mxu0
        %v1385 = vadd.f32 0.0, %v1384
        %v1386 = vpop.f32.mrf.mxu0
        %v1387 = vadd.f32 0.0, %v1386
        %1388 = vmatmul.bf16.gmra.mxu0 %v1323
        %v1389 = vpop.f32.mrf.mxu0
        %v1390 = vadd.f32 0.0, %v1389
        %v1391 = vpop.f32.mrf.mxu0
        %v1392 = vadd.f32 0.0, %v1391
        %1393 = vmatmul.bf16.gmra.mxu0 %v1326
        %v1394 = vpop.f32.mrf.mxu0
        %v1395 = vadd.f32 0.0, %v1394
        %v1396 = vpop.f32.mrf.mxu0
        %v1397 = vadd.f32 0.0, %v1396
        %1398 = vmatmul.bf16.gmra.mxu0 %v1329
        %v1399 = vpop.f32.mrf.mxu0
        %v1400 = vadd.f32 0.0, %v1399
        %v1401 = vpop.f32.mrf.mxu0
        %v1402 = vadd.f32 0.0, %v1401
        %1403 = vmatmul.bf16.gmra.mxu0 %v1332
        %v1404 = vpop.f32.mrf.mxu0
        %v1405 = vadd.f32 0.0, %v1404
        %v1406 = vpop.f32.mrf.mxu0
        %v1407 = vadd.f32 0.0, %v1406
        %1408 = vmatmul.bf16.gmra.mxu0 %v1335
        %v1409 = vpop.f32.mrf.mxu0
        %v1410 = vadd.f32 0.0, %v1409
        %v1411 = vpop.f32.mrf.mxu0
        %v1412 = vadd.f32 0.0, %v1411
        %1413 = vmatmul.bf16.gmra.mxu0 %v1338
        %v1414 = vpop.f32.mrf.mxu0
        %v1415 = vadd.f32 0.0, %v1414
        %v1416 = vpop.f32.mrf.mxu0
        %v1417 = vadd.f32 0.0, %v1416
        %1418 = vmatmul.bf16.gmra.mxu0 %v1341
        %v1419 = vpop.f32.mrf.mxu0
        %v1420 = vadd.f32 0.0, %v1419
        %v1421 = vpop.f32.mrf.mxu0
        %v1422 = vadd.f32 0.0, %v1421
        %1423 = vmatmul.bf16.gmra.mxu0 %v1344
        %v1424 = vpop.f32.mrf.mxu0
        %v1425 = vadd.f32 0.0, %v1424
        %v1426 = vpop.f32.mrf.mxu0
        %v1427 = vadd.f32 0.0, %v1426
        %1428 = vmatmul.bf16.gmra.mxu0 %v1347
        %v1429 = vpop.f32.mrf.mxu0
        %v1430 = vadd.f32 0.0, %v1429
        %v1431 = vpop.f32.mrf.mxu0
        %v1432 = vadd.f32 0.0, %v1431
        %1433 = vmatmul.bf16.gmra.mxu0 %v1350
        %v1434 = vpop.f32.mrf.mxu0
        %v1435 = vadd.f32 0.0, %v1434
        %v1436 = vpop.f32.mrf.mxu0
        %v1437 = vadd.f32 0.0, %v1436
        %1438 = vmatmul.bf16.gmra.mxu0 %v1353
        %v1439 = vpop.f32.mrf.mxu0
        %v1440 = vadd.f32 0.0, %v1439
        %v1441 = vpop.f32.mrf.mxu0
        %v1442 = vadd.f32 0.0, %v1441
        %1443 = vdwg.mxu0
        %v1444 = vadd.f32 %v1115, %v1365
        %v1445 = vadd.f32 %v1117, %v1367
        %v1446 = vadd.f32 %v1120, %v1370
        %v1447 = vadd.f32 %v1122, %v1372
        %v1448 = vadd.f32 %v1125, %v1375
        %v1449 = vadd.f32 %v1127, %v1377
        %v1450 = vadd.f32 %v1130, %v1380
        %v1451 = vadd.f32 %v1132, %v1382
        %v1452 = vadd.f32 %v1135, %v1385
        %v1453 = vadd.f32 %v1137, %v1387
        %v1454 = vadd.f32 %v1140, %v1390
        %v1455 = vadd.f32 %v1142, %v1392
        %v1456 = vadd.f32 %v1145, %v1395
        %v1457 = vadd.f32 %v1147, %v1397
        %v1458 = vadd.f32 %v1150, %v1400
        %v1459 = vadd.f32 %v1152, %v1402
        %v1460 = vadd.f32 %v1155, %v1405
        %v1461 = vadd.f32 %v1157, %v1407
        %v1462 = vadd.f32 %v1160, %v1410
        %v1463 = vadd.f32 %v1162, %v1412
        %v1464 = vadd.f32 %v1165, %v1415
        %v1465 = vadd.f32 %v1167, %v1417
        %v1466 = vadd.f32 %v1170, %v1420
        %v1467 = vadd.f32 %v1172, %v1422
        %v1468 = vadd.f32 %v1175, %v1425
        %v1469 = vadd.f32 %v1177, %v1427
        %v1470 = vadd.f32 %v1180, %v1430
        %v1471 = vadd.f32 %v1182, %v1432
        %v1472 = vadd.f32 %v1185, %v1435
        %v1473 = vadd.f32 %v1187, %v1437
        %v1474 = vadd.f32 %v1190, %v1440
        %v1475 = vadd.f32 %v1192, %v1442
        %v1476 = vld [vmem:[%s2] sm:$0x1]
        %v1478 = vperm.slane %v1476, 0
        %v1480 = vadd.f32 %v1444, %v1478
        %v1481 = vadd.f32 %v1445, %v1478
        %v1482 = vadd.f32 %v1446, %v1478
        %v1483 = vadd.f32 %v1447, %v1478
        %v1484 = vadd.f32 %v1448, %v1478
        %v1485 = vadd.f32 %v1449, %v1478
        %v1486 = vadd.f32 %v1450, %v1478
        %v1487 = vadd.f32 %v1451, %v1478
        %v1488 = vadd.f32 %v1452, %v1478
        %v1489 = vadd.f32 %v1453, %v1478
        %v1490 = vadd.f32 %v1454, %v1478
        %v1491 = vadd.f32 %v1455, %v1478
        %v1492 = vadd.f32 %v1456, %v1478
        %v1493 = vadd.f32 %v1457, %v1478
        %v1494 = vadd.f32 %v1458, %v1478
        %v1495 = vadd.f32 %v1459, %v1478
        %v1496 = vadd.f32 %v1460, %v1478
        %v1497 = vadd.f32 %v1461, %v1478
        %v1498 = vadd.f32 %v1462, %v1478
        %v1499 = vadd.f32 %v1463, %v1478
        %v1500 = vadd.f32 %v1464, %v1478
        %v1501 = vadd.f32 %v1465, %v1478
        %v1502 = vadd.f32 %v1466, %v1478
        %v1503 = vadd.f32 %v1467, %v1478
        %v1504 = vadd.f32 %v1468, %v1478
        %v1505 = vadd.f32 %v1469, %v1478
        %v1506 = vadd.f32 %v1470, %v1478
        %v1507 = vadd.f32 %v1471, %v1478
        %v1508 = vadd.f32 %v1472, %v1478
        %v1509 = vadd.f32 %v1473, %v1478
        %v1510 = vadd.f32 %v1474, %v1478
        %v1511 = vadd.f32 %v1475, %v1478
        %v1512 = vmax.f32 %v1480, 0.0
        %v1513 = vmax.f32 %v1481, 0.0
        %v1514 = vmax.f32 %v1482, 0.0
        %v1515 = vmax.f32 %v1483, 0.0
        %v1516 = vmax.f32 %v1484, 0.0
        %v1517 = vmax.f32 %v1485, 0.0
        %v1518 = vmax.f32 %v1486, 0.0
        %v1519 = vmax.f32 %v1487, 0.0
        %v1520 = vmax.f32 %v1488, 0.0
        %v1521 = vmax.f32 %v1489, 0.0
        %v1522 = vmax.f32 %v1490, 0.0
        %v1523 = vmax.f32 %v1491, 0.0
        %v1524 = vmax.f32 %v1492, 0.0
        %v1525 = vmax.f32 %v1493, 0.0
        %v1526 = vmax.f32 %v1494, 0.0
        %v1527 = vmax.f32 %v1495, 0.0
        %v1528 = vmax.f32 %v1496, 0.0
        %v1529 = vmax.f32 %v1497, 0.0
        %v1530 = vmax.f32 %v1498, 0.0
        %v1531 = vmax.f32 %v1499, 0.0
        %v1532 = vmax.f32 %v1500, 0.0
        %v1533 = vmax.f32 %v1501, 0.0
        %v1534 = vmax.f32 %v1502, 0.0
        %v1535 = vmax.f32 %v1503, 0.0
        %v1536 = vmax.f32 %v1504, 0.0
        %v1537 = vmax.f32 %v1505, 0.0
        %v1538 = vmax.f32 %v1506, 0.0
        %v1539 = vmax.f32 %v1507, 0.0
        %v1540 = vmax.f32 %v1508, 0.0
        %v1541 = vmax.f32 %v1509, 0.0
        %v1542 = vmax.f32 %v1510, 0.0
        %v1543 = vmax.f32 %v1511, 0.0
        %v1544 = vand.u32 2147483647, %v1480
        %v1545 = vand.u32 2147483647, %v1481
        %v1546 = vand.u32 2147483647, %v1482
        %v1547 = vand.u32 2147483647, %v1483
        %v1548 = vand.u32 2147483647, %v1484
        %v1549 = vand.u32 2147483647, %v1485
        %v1550 = vand.u32 2147483647, %v1486
        %v1551 = vand.u32 2147483647, %v1487
        %v1552 = vand.u32 2147483647, %v1488
        %v1553 = vand.u32 2147483647, %v1489
        %v1554 = vand.u32 2147483647, %v1490
        %v1555 = vand.u32 2147483647, %v1491
        %v1556 = vand.u32 2147483647, %v1492
        %v1557 = vand.u32 2147483647, %v1493
        %v1558 = vand.u32 2147483647, %v1494
        %v1559 = vand.u32 2147483647, %v1495
        %v1560 = vand.u32 2147483647, %v1496
        %v1561 = vand.u32 2147483647, %v1497
        %v1562 = vand.u32 2147483647, %v1498
        %v1563 = vand.u32 2147483647, %v1499
        %v1564 = vand.u32 2147483647, %v1500
        %v1565 = vand.u32 2147483647, %v1501
        %v1566 = vand.u32 2147483647, %v1502
        %v1567 = vand.u32 2147483647, %v1503
        %v1568 = vand.u32 2147483647, %v1504
        %v1569 = vand.u32 2147483647, %v1505
        %v1570 = vand.u32 2147483647, %v1506
        %v1571 = vand.u32 2147483647, %v1507
        %v1572 = vand.u32 2147483647, %v1508
        %v1573 = vand.u32 2147483647, %v1509
        %v1574 = vand.u32 2147483647, %v1510
        %v1575 = vand.u32 2147483647, %v1511
        %v1576 = vsub.f32 0.0, %v1544
        %v1577 = vsub.f32 0.0, %v1545
        %v1578 = vsub.f32 0.0, %v1546
        %v1579 = vsub.f32 0.0, %v1547
        %v1580 = vsub.f32 0.0, %v1548
        %v1581 = vsub.f32 0.0, %v1549
        %v1582 = vsub.f32 0.0, %v1550
        %v1583 = vsub.f32 0.0, %v1551
        %v1584 = vsub.f32 0.0, %v1552
        %v1585 = vsub.f32 0.0, %v1553
        %v1586 = vsub.f32 0.0, %v1554
        %v1587 = vsub.f32 0.0, %v1555
        %v1588 = vsub.f32 0.0, %v1556
        %v1589 = vsub.f32 0.0, %v1557
        %v1590 = vsub.f32 0.0, %v1558
        %v1591 = vsub.f32 0.0, %v1559
        %v1592 = vsub.f32 0.0, %v1560
        %v1593 = vsub.f32 0.0, %v1561
        %v1594 = vsub.f32 0.0, %v1562
        %v1595 = vsub.f32 0.0, %v1563
        %v1596 = vsub.f32 0.0, %v1564
        %v1597 = vsub.f32 0.0, %v1565
        %v1598 = vsub.f32 0.0, %v1566
        %v1599 = vsub.f32 0.0, %v1567
        %v1600 = vsub.f32 0.0, %v1568
        %v1601 = vsub.f32 0.0, %v1569
        %v1602 = vsub.f32 0.0, %v1570
        %v1603 = vsub.f32 0.0, %v1571
        %v1604 = vsub.f32 0.0, %v1572
        %v1605 = vsub.f32 0.0, %v1573
        %v1606 = vsub.f32 0.0, %v1574
        %v1607 = vsub.f32 0.0, %v1575
        %v1608 = vmul.f32 %v1576, 1.442695
        %v1609 = vpow.pop %v1608
        %v1610 = vmul.f32 %v1577, 1.442695
        %v1611 = vpow.pop %v1610
        %v1612 = vmul.f32 %v1578, 1.442695
        %v1613 = vpow.pop %v1612
        %v1614 = vmul.f32 %v1579, 1.442695
        %v1615 = vpow.pop %v1614
        %v1616 = vmul.f32 %v1580, 1.442695
        %v1617 = vpow.pop %v1616
        %v1618 = vmul.f32 %v1581, 1.442695
        %v1619 = vpow.pop %v1618
        %v1620 = vmul.f32 %v1582, 1.442695
        %v1621 = vpow.pop %v1620
        %v1622 = vmul.f32 %v1583, 1.442695
        %v1623 = vpow.pop %v1622
        %v1624 = vmul.f32 %v1584, 1.442695
        %v1625 = vpow.pop %v1624
        %v1626 = vmul.f32 %v1585, 1.442695
        %v1627 = vpow.pop %v1626
        %v1628 = vmul.f32 %v1586, 1.442695
        %v1629 = vpow.pop %v1628
        %v1630 = vmul.f32 %v1587, 1.442695
        %v1631 = vpow.pop %v1630
        %v1632 = vmul.f32 %v1588, 1.442695
        %v1633 = vpow.pop %v1632
        %v1634 = vmul.f32 %v1589, 1.442695
        %v1635 = vpow.pop %v1634
        %v1636 = vmul.f32 %v1590, 1.442695
        %v1637 = vpow.pop %v1636
        %v1638 = vmul.f32 %v1591, 1.442695
        %v1639 = vpow.pop %v1638
        %v1640 = vmul.f32 %v1592, 1.442695
        %v1641 = vpow.pop %v1640
        %v1642 = vmul.f32 %v1593, 1.442695
        %v1643 = vpow.pop %v1642
        %v1644 = vmul.f32 %v1594, 1.442695
        %v1645 = vpow.pop %v1644
        %v1646 = vmul.f32 %v1595, 1.442695
        %v1647 = vpow.pop %v1646
        %v1648 = vmul.f32 %v1596, 1.442695
        %v1649 = vpow.pop %v1648
        %v1650 = vmul.f32 %v1597, 1.442695
        %v1651 = vpow.pop %v1650
        %v1652 = vmul.f32 %v1598, 1.442695
        %v1653 = vpow.pop %v1652
        %v1654 = vmul.f32 %v1599, 1.442695
        %v1655 = vpow.pop %v1654
        %v1656 = vmul.f32 %v1600, 1.442695
        %v1657 = vpow.pop %v1656
        %v1658 = vmul.f32 %v1601, 1.442695
        %v1659 = vpow.pop %v1658
        %v1660 = vmul.f32 %v1602, 1.442695
        %v1661 = vpow.pop %v1660
        %v1662 = vmul.f32 %v1603, 1.442695
        %v1663 = vpow.pop %v1662
        %v1664 = vmul.f32 %v1604, 1.442695
        %v1665 = vpow.pop %v1664
        %v1666 = vmul.f32 %v1605, 1.442695
        %v1667 = vpow.pop %v1666
        %v1668 = vmul.f32 %v1606, 1.442695
        %v1669 = vpow.pop %v1668
        %v1670 = vmul.f32 %v1607, 1.442695
        %v1671 = vpow.pop %v1670
        %v1672 = vadd.f32 %v1609, 1.0
        %v1673 = vlog2.pop %v1672
        %v1674 = vmul.f32 %v1673, 0.6931472
        %v1675 = vmul.f32 -0.5, %v1609
        %v1676 = vadd.f32 %v1675, 1.0
        %v1677 = vmul.f32 %v1676, %v1609
        %v1678 = vand.u32 2147483647, %v1609
        %vm1679 = vcmp.lt.f32.partialorder %v1678, 0.0004427343
        %v1680 = vsel %vm1679, %v1677, %v1674
        %v1681 = vadd.f32 %v1611, 1.0
        %v1682 = vlog2.pop %v1681
        %v1683 = vmul.f32 %v1682, 0.6931472
        %v1684 = vmul.f32 -0.5, %v1611
        %v1685 = vadd.f32 %v1684, 1.0
        %v1686 = vmul.f32 %v1685, %v1611
        %v1687 = vand.u32 2147483647, %v1611
        %vm1688 = vcmp.lt.f32.partialorder %v1687, 0.0004427343
        %v1689 = vsel %vm1688, %v1686, %v1683
        %v1690 = vadd.f32 %v1613, 1.0
        %v1691 = vlog2.pop %v1690
        %v1692 = vmul.f32 %v1691, 0.6931472
        %v1693 = vmul.f32 -0.5, %v1613
        %v1694 = vadd.f32 %v1693, 1.0
        %v1695 = vmul.f32 %v1694, %v1613
        %v1696 = vand.u32 2147483647, %v1613
        %vm1697 = vcmp.lt.f32.partialorder %v1696, 0.0004427343
        %v1698 = vsel %vm1697, %v1695, %v1692
        %v1699 = vadd.f32 %v1615, 1.0
        %v1700 = vlog2.pop %v1699
        %v1701 = vmul.f32 %v1700, 0.6931472
        %v1702 = vmul.f32 -0.5, %v1615
        %v1703 = vadd.f32 %v1702, 1.0
        %v1704 = vmul.f32 %v1703, %v1615
        %v1705 = vand.u32 2147483647, %v1615
        %vm1706 = vcmp.lt.f32.partialorder %v1705, 0.0004427343
        %v1707 = vsel %vm1706, %v1704, %v1701
        %v1708 = vadd.f32 %v1617, 1.0
        %v1709 = vlog2.pop %v1708
        %v1710 = vmul.f32 %v1709, 0.6931472
        %v1711 = vmul.f32 -0.5, %v1617
        %v1712 = vadd.f32 %v1711, 1.0
        %v1713 = vmul.f32 %v1712, %v1617
        %v1714 = vand.u32 2147483647, %v1617
        %vm1715 = vcmp.lt.f32.partialorder %v1714, 0.0004427343
        %v1716 = vsel %vm1715, %v1713, %v1710
        %v1717 = vadd.f32 %v1619, 1.0
        %v1718 = vlog2.pop %v1717
        %v1719 = vmul.f32 %v1718, 0.6931472
        %v1720 = vmul.f32 -0.5, %v1619
        %v1721 = vadd.f32 %v1720, 1.0
        %v1722 = vmul.f32 %v1721, %v1619
        %v1723 = vand.u32 2147483647, %v1619
        %vm1724 = vcmp.lt.f32.partialorder %v1723, 0.0004427343
        %v1725 = vsel %vm1724, %v1722, %v1719
        %v1726 = vadd.f32 %v1621, 1.0
        %v1727 = vlog2.pop %v1726
        %v1728 = vmul.f32 %v1727, 0.6931472
        %v1729 = vmul.f32 -0.5, %v1621
        %v1730 = vadd.f32 %v1729, 1.0
        %v1731 = vmul.f32 %v1730, %v1621
        %v1732 = vand.u32 2147483647, %v1621
        %vm1733 = vcmp.lt.f32.partialorder %v1732, 0.0004427343
        %v1734 = vsel %vm1733, %v1731, %v1728
        %v1735 = vadd.f32 %v1623, 1.0
        %v1736 = vlog2.pop %v1735
        %v1737 = vmul.f32 %v1736, 0.6931472
        %v1738 = vmul.f32 -0.5, %v1623
        %v1739 = vadd.f32 %v1738, 1.0
        %v1740 = vmul.f32 %v1739, %v1623
        %v1741 = vand.u32 2147483647, %v1623
        %vm1742 = vcmp.lt.f32.partialorder %v1741, 0.0004427343
        %v1743 = vsel %vm1742, %v1740, %v1737
        %v1744 = vadd.f32 %v1625, 1.0
        %v1745 = vlog2.pop %v1744
        %v1746 = vmul.f32 %v1745, 0.6931472
        %v1747 = vmul.f32 -0.5, %v1625
        %v1748 = vadd.f32 %v1747, 1.0
        %v1749 = vmul.f32 %v1748, %v1625
        %v1750 = vand.u32 2147483647, %v1625
        %vm1751 = vcmp.lt.f32.partialorder %v1750, 0.0004427343
        %v1752 = vsel %vm1751, %v1749, %v1746
        %v1753 = vadd.f32 %v1627, 1.0
        %v1754 = vlog2.pop %v1753
        %v1755 = vmul.f32 %v1754, 0.6931472
        %v1756 = vmul.f32 -0.5, %v1627
        %v1757 = vadd.f32 %v1756, 1.0
        %v1758 = vmul.f32 %v1757, %v1627
        %v1759 = vand.u32 2147483647, %v1627
        %vm1760 = vcmp.lt.f32.partialorder %v1759, 0.0004427343
        %v1761 = vsel %vm1760, %v1758, %v1755
        %v1762 = vadd.f32 %v1629, 1.0
        %v1763 = vlog2.pop %v1762
        %v1764 = vmul.f32 %v1763, 0.6931472
        %v1765 = vmul.f32 -0.5, %v1629
        %v1766 = vadd.f32 %v1765, 1.0
        %v1767 = vmul.f32 %v1766, %v1629
        %v1768 = vand.u32 2147483647, %v1629
        %vm1769 = vcmp.lt.f32.partialorder %v1768, 0.0004427343
        %v1770 = vsel %vm1769, %v1767, %v1764
        %v1771 = vadd.f32 %v1631, 1.0
        %v1772 = vlog2.pop %v1771
        %v1773 = vmul.f32 %v1772, 0.6931472
        %v1774 = vmul.f32 -0.5, %v1631
        %v1775 = vadd.f32 %v1774, 1.0
        %v1776 = vmul.f32 %v1775, %v1631
        %v1777 = vand.u32 2147483647, %v1631
        %vm1778 = vcmp.lt.f32.partialorder %v1777, 0.0004427343
        %v1779 = vsel %vm1778, %v1776, %v1773
        %v1780 = vadd.f32 %v1633, 1.0
        %v1781 = vlog2.pop %v1780
        %v1782 = vmul.f32 %v1781, 0.6931472
        %v1783 = vmul.f32 -0.5, %v1633
        %v1784 = vadd.f32 %v1783, 1.0
        %v1785 = vmul.f32 %v1784, %v1633
        %v1786 = vand.u32 2147483647, %v1633
        %vm1787 = vcmp.lt.f32.partialorder %v1786, 0.0004427343
        %v1788 = vsel %vm1787, %v1785, %v1782
        %v1789 = vadd.f32 %v1635, 1.0
        %v1790 = vlog2.pop %v1789
        %v1791 = vmul.f32 %v1790, 0.6931472
        %v1792 = vmul.f32 -0.5, %v1635
        %v1793 = vadd.f32 %v1792, 1.0
        %v1794 = vmul.f32 %v1793, %v1635
        %v1795 = vand.u32 2147483647, %v1635
        %vm1796 = vcmp.lt.f32.partialorder %v1795, 0.0004427343
        %v1797 = vsel %vm1796, %v1794, %v1791
        %v1798 = vadd.f32 %v1637, 1.0
        %v1799 = vlog2.pop %v1798
        %v1800 = vmul.f32 %v1799, 0.6931472
        %v1801 = vmul.f32 -0.5, %v1637
        %v1802 = vadd.f32 %v1801, 1.0
        %v1803 = vmul.f32 %v1802, %v1637
        %v1804 = vand.u32 2147483647, %v1637
        %vm1805 = vcmp.lt.f32.partialorder %v1804, 0.0004427343
        %v1806 = vsel %vm1805, %v1803, %v1800
        %v1807 = vadd.f32 %v1639, 1.0
        %v1808 = vlog2.pop %v1807
        %v1809 = vmul.f32 %v1808, 0.6931472
        %v1810 = vmul.f32 -0.5, %v1639
        %v1811 = vadd.f32 %v1810, 1.0
        %v1812 = vmul.f32 %v1811, %v1639
        %v1813 = vand.u32 2147483647, %v1639
        %vm1814 = vcmp.lt.f32.partialorder %v1813, 0.0004427343
        %v1815 = vsel %vm1814, %v1812, %v1809
        %v1816 = vadd.f32 %v1641, 1.0
        %v1817 = vlog2.pop %v1816
        %v1818 = vmul.f32 %v1817, 0.6931472
        %v1819 = vmul.f32 -0.5, %v1641
        %v1820 = vadd.f32 %v1819, 1.0
        %v1821 = vmul.f32 %v1820, %v1641
        %v1822 = vand.u32 2147483647, %v1641
        %vm1823 = vcmp.lt.f32.partialorder %v1822, 0.0004427343
        %v1824 = vsel %vm1823, %v1821, %v1818
        %v1825 = vadd.f32 %v1643, 1.0
        %v1826 = vlog2.pop %v1825
        %v1827 = vmul.f32 %v1826, 0.6931472
        %v1828 = vmul.f32 -0.5, %v1643
        %v1829 = vadd.f32 %v1828, 1.0
        %v1830 = vmul.f32 %v1829, %v1643
        %v1831 = vand.u32 2147483647, %v1643
        %vm1832 = vcmp.lt.f32.partialorder %v1831, 0.0004427343
        %v1833 = vsel %vm1832, %v1830, %v1827
        %v1834 = vadd.f32 %v1645, 1.0
        %v1835 = vlog2.pop %v1834
        %v1836 = vmul.f32 %v1835, 0.6931472
        %v1837 = vmul.f32 -0.5, %v1645
        %v1838 = vadd.f32 %v1837, 1.0
        %v1839 = vmul.f32 %v1838, %v1645
        %v1840 = vand.u32 2147483647, %v1645
        %vm1841 = vcmp.lt.f32.partialorder %v1840, 0.0004427343
        %v1842 = vsel %vm1841, %v1839, %v1836
        %v1843 = vadd.f32 %v1647, 1.0
        %v1844 = vlog2.pop %v1843
        %v1845 = vmul.f32 %v1844, 0.6931472
        %v1846 = vmul.f32 -0.5, %v1647
        %v1847 = vadd.f32 %v1846, 1.0
        %v1848 = vmul.f32 %v1847, %v1647
        %v1849 = vand.u32 2147483647, %v1647
        %vm1850 = vcmp.lt.f32.partialorder %v1849, 0.0004427343
        %v1851 = vsel %vm1850, %v1848, %v1845
        %v1852 = vadd.f32 %v1649, 1.0
        %v1853 = vlog2.pop %v1852
        %v1854 = vmul.f32 %v1853, 0.6931472
        %v1855 = vmul.f32 -0.5, %v1649
        %v1856 = vadd.f32 %v1855, 1.0
        %v1857 = vmul.f32 %v1856, %v1649
        %v1858 = vand.u32 2147483647, %v1649
        %vm1859 = vcmp.lt.f32.partialorder %v1858, 0.0004427343
        %v1860 = vsel %vm1859, %v1857, %v1854
        %v1861 = vadd.f32 %v1651, 1.0
        %v1862 = vlog2.pop %v1861
        %v1863 = vmul.f32 %v1862, 0.6931472
        %v1864 = vmul.f32 -0.5, %v1651
        %v1865 = vadd.f32 %v1864, 1.0
        %v1866 = vmul.f32 %v1865, %v1651
        %v1867 = vand.u32 2147483647, %v1651
        %vm1868 = vcmp.lt.f32.partialorder %v1867, 0.0004427343
        %v1869 = vsel %vm1868, %v1866, %v1863
        %v1870 = vadd.f32 %v1653, 1.0
        %v1871 = vlog2.pop %v1870
        %v1872 = vmul.f32 %v1871, 0.6931472
        %v1873 = vmul.f32 -0.5, %v1653
        %v1874 = vadd.f32 %v1873, 1.0
        %v1875 = vmul.f32 %v1874, %v1653
        %v1876 = vand.u32 2147483647, %v1653
        %vm1877 = vcmp.lt.f32.partialorder %v1876, 0.0004427343
        %v1878 = vsel %vm1877, %v1875, %v1872
        %v1879 = vadd.f32 %v1655, 1.0
        %v1880 = vlog2.pop %v1879
        %v1881 = vmul.f32 %v1880, 0.6931472
        %v1882 = vmul.f32 -0.5, %v1655
        %v1883 = vadd.f32 %v1882, 1.0
        %v1884 = vmul.f32 %v1883, %v1655
        %v1885 = vand.u32 2147483647, %v1655
        %vm1886 = vcmp.lt.f32.partialorder %v1885, 0.0004427343
        %v1887 = vsel %vm1886, %v1884, %v1881
        %v1888 = vadd.f32 %v1657, 1.0
        %v1889 = vlog2.pop %v1888
        %v1890 = vmul.f32 %v1889, 0.6931472
        %v1891 = vmul.f32 -0.5, %v1657
        %v1892 = vadd.f32 %v1891, 1.0
        %v1893 = vmul.f32 %v1892, %v1657
        %v1894 = vand.u32 2147483647, %v1657
        %vm1895 = vcmp.lt.f32.partialorder %v1894, 0.0004427343
        %v1896 = vsel %vm1895, %v1893, %v1890
        %v1897 = vadd.f32 %v1659, 1.0
        %v1898 = vlog2.pop %v1897
        %v1899 = vmul.f32 %v1898, 0.6931472
        %v1900 = vmul.f32 -0.5, %v1659
        %v1901 = vadd.f32 %v1900, 1.0
        %v1902 = vmul.f32 %v1901, %v1659
        %v1903 = vand.u32 2147483647, %v1659
        %vm1904 = vcmp.lt.f32.partialorder %v1903, 0.0004427343
        %v1905 = vsel %vm1904, %v1902, %v1899
        %v1906 = vadd.f32 %v1661, 1.0
        %v1907 = vlog2.pop %v1906
        %v1908 = vmul.f32 %v1907, 0.6931472
        %v1909 = vmul.f32 -0.5, %v1661
        %v1910 = vadd.f32 %v1909, 1.0
        %v1911 = vmul.f32 %v1910, %v1661
        %v1912 = vand.u32 2147483647, %v1661
        %vm1913 = vcmp.lt.f32.partialorder %v1912, 0.0004427343
        %v1914 = vsel %vm1913, %v1911, %v1908
        %v1915 = vadd.f32 %v1663, 1.0
        %v1916 = vlog2.pop %v1915
        %v1917 = vmul.f32 %v1916, 0.6931472
        %v1918 = vmul.f32 -0.5, %v1663
        %v1919 = vadd.f32 %v1918, 1.0
        %v1920 = vmul.f32 %v1919, %v1663
        %v1921 = vand.u32 2147483647, %v1663
        %vm1922 = vcmp.lt.f32.partialorder %v1921, 0.0004427343
        %v1923 = vsel %vm1922, %v1920, %v1917
        %v1924 = vadd.f32 %v1665, 1.0
        %v1925 = vlog2.pop %v1924
        %v1926 = vmul.f32 %v1925, 0.6931472
        %v1927 = vmul.f32 -0.5, %v1665
        %v1928 = vadd.f32 %v1927, 1.0
        %v1929 = vmul.f32 %v1928, %v1665
        %v1930 = vand.u32 2147483647, %v1665
        %vm1931 = vcmp.lt.f32.partialorder %v1930, 0.0004427343
        %v1932 = vsel %vm1931, %v1929, %v1926
        %v1933 = vadd.f32 %v1667, 1.0
        %v1934 = vlog2.pop %v1933
        %v1935 = vmul.f32 %v1934, 0.6931472
        %v1936 = vmul.f32 -0.5, %v1667
        %v1937 = vadd.f32 %v1936, 1.0
        %v1938 = vmul.f32 %v1937, %v1667
        %v1939 = vand.u32 2147483647, %v1667
        %vm1940 = vcmp.lt.f32.partialorder %v1939, 0.0004427343
        %v1941 = vsel %vm1940, %v1938, %v1935
        %v1942 = vadd.f32 %v1669, 1.0
        %v1943 = vlog2.pop %v1942
        %v1944 = vmul.f32 %v1943, 0.6931472
        %v1945 = vmul.f32 -0.5, %v1669
        %v1946 = vadd.f32 %v1945, 1.0
        %v1947 = vmul.f32 %v1946, %v1669
        %v1948 = vand.u32 2147483647, %v1669
        %vm1949 = vcmp.lt.f32.partialorder %v1948, 0.0004427343
        %v1950 = vsel %vm1949, %v1947, %v1944
        %v1951 = vadd.f32 %v1671, 1.0
        %v1952 = vlog2.pop %v1951
        %v1953 = vmul.f32 %v1952, 0.6931472
        %v1954 = vmul.f32 -0.5, %v1671
        %v1955 = vadd.f32 %v1954, 1.0
        %v1956 = vmul.f32 %v1955, %v1671
        %v1957 = vand.u32 2147483647, %v1671
        %vm1958 = vcmp.lt.f32.partialorder %v1957, 0.0004427343
        %v1959 = vsel %vm1958, %v1956, %v1953
        %v1960 = vadd.f32 %v1512, %v1680
        %v1961 = vadd.f32 %v1513, %v1689
        %v1962 = vadd.f32 %v1514, %v1698
        %v1963 = vadd.f32 %v1515, %v1707
        %v1964 = vadd.f32 %v1516, %v1716
        %v1965 = vadd.f32 %v1517, %v1725
        %v1966 = vadd.f32 %v1518, %v1734
        %v1967 = vadd.f32 %v1519, %v1743
        %v1968 = vadd.f32 %v1520, %v1752
        %v1969 = vadd.f32 %v1521, %v1761
        %v1970 = vadd.f32 %v1522, %v1770
        %v1971 = vadd.f32 %v1523, %v1779
        %v1972 = vadd.f32 %v1524, %v1788
        %v1973 = vadd.f32 %v1525, %v1797
        %v1974 = vadd.f32 %v1526, %v1806
        %v1975 = vadd.f32 %v1527, %v1815
        %v1976 = vadd.f32 %v1528, %v1824
        %v1977 = vadd.f32 %v1529, %v1833
        %v1978 = vadd.f32 %v1530, %v1842
        %v1979 = vadd.f32 %v1531, %v1851
        %v1980 = vadd.f32 %v1532, %v1860
        %v1981 = vadd.f32 %v1533, %v1869
        %v1982 = vadd.f32 %v1534, %v1878
        %v1983 = vadd.f32 %v1535, %v1887
        %v1984 = vadd.f32 %v1536, %v1896
        %v1985 = vadd.f32 %v1537, %v1905
        %v1986 = vadd.f32 %v1538, %v1914
        %v1987 = vadd.f32 %v1539, %v1923
        %v1988 = vadd.f32 %v1540, %v1932
        %v1989 = vadd.f32 %v1541, %v1941
        %v1990 = vadd.f32 %v1542, %v1950
        %v1991 = vadd.f32 %v1543, %v1959
        %v1992 = vpack.c.bf16 %v1961, %v1960
        %v1993 = vpack.c.bf16 %v1963, %v1962
        %v1994 = vpack.c.bf16 %v1965, %v1964
        %v1995 = vpack.c.bf16 %v1967, %v1966
        %v1996 = vpack.c.bf16 %v1969, %v1968
        %v1997 = vpack.c.bf16 %v1971, %v1970
        %v1998 = vpack.c.bf16 %v1973, %v1972
        %v1999 = vpack.c.bf16 %v1975, %v1974
        %v2000 = vpack.c.bf16 %v1977, %v1976
        %v2001 = vpack.c.bf16 %v1979, %v1978
        %v2002 = vpack.c.bf16 %v1981, %v1980
        %v2003 = vpack.c.bf16 %v1983, %v1982
        %v2004 = vpack.c.bf16 %v1985, %v1984
        %v2005 = vpack.c.bf16 %v1987, %v1986
        %v2006 = vpack.c.bf16 %v1989, %v1988
        %v2007 = vpack.c.bf16 %v1991, %v1990
        %v2008 = vld [vmem:[%s3] sm:$0xf]
        %v2009 = vld [vmem:[%s3 + $0x4] sm:$0xf]
        %v2010 = vld [vmem:[%s3 + $0x8] sm:$0xf]
        %v2011 = vld [vmem:[%s3 + $0xc] sm:$0xf]
        %v2012 = vld [vmem:[%s3 + $0x10] sm:$0xf]
        %v2013 = vld [vmem:[%s3 + $0x14] sm:$0xf]
        %v2014 = vld [vmem:[%s3 + $0x18] sm:$0xf]
        %v2015 = vld [vmem:[%s3 + $0x1c] sm:$0xf]
        %v2016 = vld [vmem:[%s4] sm:$0x1]
        %v2018 = vperm.slane %v2016, 0
        %v2028 = vunpack.c.l.b16 %v2008
        %v2029 = vunpack.c.l.b16 %v2009
        %v2030 = vunpack.c.l.b16 %v2010
        %v2031 = vunpack.c.l.b16 %v2011
        %v2032 = vunpack.c.l.b16 %v2012
        %v2033 = vunpack.c.l.b16 %v2013
        %v2034 = vunpack.c.l.b16 %v2014
        %v2035 = vunpack.c.l.b16 %v2015
        %v2036 = vpack.c.b16 %v2029, %v2028
        %v2037 = vpack.c.b16 %v2031, %v2030
        %v2038 = vpack.c.b16 %v2033, %v2032
        %v2039 = vpack.c.b16 %v2035, %v2034
        %vm2044 = vcmask 523264
        %v2046 = vsel %vm2044, %v1992, 0
        %v2049 = vsel %vm2044, %v1993, 0
        %v2052 = vsel %vm2044, %v1994, 0
        %v2055 = vsel %vm2044, %v1995, 0
        %v2058 = vsel %vm2044, %v1996, 0
        %v2061 = vsel %vm2044, %v1997, 0
        %v2064 = vsel %vm2044, %v1998, 0
        %v2067 = vsel %vm2044, %v1999, 0
        %v2070 = vsel %vm2044, %v2000, 0
        %v2073 = vsel %vm2044, %v2001, 0
        %v2076 = vsel %vm2044, %v2002, 0
        %v2079 = vsel %vm2044, %v2003, 0
        %v2082 = vsel %vm2044, %v2004, 0
        %v2085 = vsel %vm2044, %v2005, 0
        %v2088 = vsel %vm2044, %v2006, 0
        %v2091 = vsel %vm2044, %v2007, 0
        %2093 = vmatpush.bf16.msra.mxu0 0
        %2094 = vmatpush.bf16.msra.mxu0 0
        %2095 = vmatpush.bf16.msra.mxu0 0
        %2096 = vmatpush.bf16.msra.mxu0 0
        %2097 = vmatpush.bf16.msra.mxu0 %v2039
        %2098 = vmatpush.bf16.msra.mxu0 %v2038
        %2099 = vmatpush.bf16.msra.mxu0 %v2037
        %2100 = vmatpush.bf16.msra.mxu0 %v2036
        %2101 = vmatmul.bf16.gmra.mxu0 %v2046
        %v2102 = vpop.f32.mrf.mxu0
        %v2103 = vadd.f32 %v2018, %v2102
        %v2104 = vpop.f32.mrf.mxu0
        %v2105 = vadd.f32 %v2018, %v2104
        %2106 = vmatmul.bf16.gmra.mxu0 %v2049
        %v2107 = vpop.f32.mrf.mxu0
        %v2108 = vadd.f32 %v2018, %v2107
        %v2109 = vpop.f32.mrf.mxu0
        %v2110 = vadd.f32 %v2018, %v2109
        %2111 = vmatmul.bf16.gmra.mxu0 %v2052
        %v2112 = vpop.f32.mrf.mxu0
        %v2113 = vadd.f32 %v2018, %v2112
        %v2114 = vpop.f32.mrf.mxu0
        %v2115 = vadd.f32 %v2018, %v2114
        %2116 = vmatmul.bf16.gmra.mxu0 %v2055
        %v2117 = vpop.f32.mrf.mxu0
        %v2118 = vadd.f32 %v2018, %v2117
        %v2119 = vpop.f32.mrf.mxu0
        %v2120 = vadd.f32 %v2018, %v2119
        %2121 = vmatmul.bf16.gmra.mxu0 %v2058
        %v2122 = vpop.f32.mrf.mxu0
        %v2123 = vadd.f32 %v2018, %v2122
        %v2124 = vpop.f32.mrf.mxu0
        %v2125 = vadd.f32 %v2018, %v2124
        %2126 = vmatmul.bf16.gmra.mxu0 %v2061
        %v2127 = vpop.f32.mrf.mxu0
        %v2128 = vadd.f32 %v2018, %v2127
        %v2129 = vpop.f32.mrf.mxu0
        %v2130 = vadd.f32 %v2018, %v2129
        %2131 = vmatmul.bf16.gmra.mxu0 %v2064
        %v2132 = vpop.f32.mrf.mxu0
        %v2133 = vadd.f32 %v2018, %v2132
        %v2134 = vpop.f32.mrf.mxu0
        %v2135 = vadd.f32 %v2018, %v2134
        %2136 = vmatmul.bf16.gmra.mxu0 %v2067
        %v2137 = vpop.f32.mrf.mxu0
        %v2138 = vadd.f32 %v2018, %v2137
        %v2139 = vpop.f32.mrf.mxu0
        %v2140 = vadd.f32 %v2018, %v2139
        %2141 = vmatmul.bf16.gmra.mxu0 %v2070
        %v2142 = vpop.f32.mrf.mxu0
        %v2143 = vadd.f32 %v2018, %v2142
        %v2144 = vpop.f32.mrf.mxu0
        %v2145 = vadd.f32 %v2018, %v2144
        %2146 = vmatmul.bf16.gmra.mxu0 %v2073
        %v2147 = vpop.f32.mrf.mxu0
        %v2148 = vadd.f32 %v2018, %v2147
        %v2149 = vpop.f32.mrf.mxu0
        %v2150 = vadd.f32 %v2018, %v2149
        %2151 = vmatmul.bf16.gmra.mxu0 %v2076
        %v2152 = vpop.f32.mrf.mxu0
        %v2153 = vadd.f32 %v2018, %v2152
        %v2154 = vpop.f32.mrf.mxu0
        %v2155 = vadd.f32 %v2018, %v2154
        %2156 = vmatmul.bf16.gmra.mxu0 %v2079
        %v2157 = vpop.f32.mrf.mxu0
        %v2158 = vadd.f32 %v2018, %v2157
        %v2159 = vpop.f32.mrf.mxu0
        %v2160 = vadd.f32 %v2018, %v2159
        %2161 = vmatmul.bf16.gmra.mxu0 %v2082
        %v2162 = vpop.f32.mrf.mxu0
        %v2163 = vadd.f32 %v2018, %v2162
        %v2164 = vpop.f32.mrf.mxu0
        %v2165 = vadd.f32 %v2018, %v2164
        %2166 = vmatmul.bf16.gmra.mxu0 %v2085
        %v2167 = vpop.f32.mrf.mxu0
        %v2168 = vadd.f32 %v2018, %v2167
        %v2169 = vpop.f32.mrf.mxu0
        %v2170 = vadd.f32 %v2018, %v2169
        %2171 = vmatmul.bf16.gmra.mxu0 %v2088
        %v2172 = vpop.f32.mrf.mxu0
        %v2173 = vadd.f32 %v2018, %v2172
        %v2174 = vpop.f32.mrf.mxu0
        %v2175 = vadd.f32 %v2018, %v2174
        %2176 = vmatmul.bf16.gmra.mxu0 %v2091
        %v2177 = vpop.f32.mrf.mxu0
        %v2178 = vadd.f32 %v2018, %v2177
        %v2179 = vpop.f32.mrf.mxu0
        %v2180 = vadd.f32 %v2018, %v2179
        %2181 = vdwg.mxu0
        %vm2182 = vcmask 31744
        %2183 = vst.msk [vmem:[%s675] sm:$0xff] %vm2182, %v2103
        %2184 = vst.msk [vmem:[%s675 + $0x8] sm:$0xff] %vm2182, %v2105
        %2185 = vst.msk [vmem:[%s675 + $0x10] sm:$0xff] %vm2182, %v2108
        %2186 = vst.msk [vmem:[%s675 + $0x18] sm:$0xff] %vm2182, %v2110
        %2187 = vst.msk [vmem:[%s675 + $0x20] sm:$0xff] %vm2182, %v2113
        %2188 = vst.msk [vmem:[%s675 + $0x28] sm:$0xff] %vm2182, %v2115
        %2189 = vst.msk [vmem:[%s675 + $0x30] sm:$0xff] %vm2182, %v2118
        %2190 = vst.msk [vmem:[%s675 + $0x38] sm:$0xff] %vm2182, %v2120
        %2191 = vst.msk [vmem:[%s675 + $0x40] sm:$0xff] %vm2182, %v2123
        %2192 = vst.msk [vmem:[%s675 + $0x48] sm:$0xff] %vm2182, %v2125
        %2193 = vst.msk [vmem:[%s675 + $0x50] sm:$0xff] %vm2182, %v2128
        %2194 = vst.msk [vmem:[%s675 + $0x58] sm:$0xff] %vm2182, %v2130
        %2195 = vst.msk [vmem:[%s675 + $0x60] sm:$0xff] %vm2182, %v2133
        %2196 = vst.msk [vmem:[%s675 + $0x68] sm:$0xff] %vm2182, %v2135
        %2197 = vst.msk [vmem:[%s675 + $0x70] sm:$0xff] %vm2182, %v2138
        %2198 = vst.msk [vmem:[%s675 + $0x78] sm:$0xff] %vm2182, %v2140
        %2199 = vst.msk [vmem:[%s675 + $0x80] sm:$0xff] %vm2182, %v2143
        %2200 = vst.msk [vmem:[%s675 + $0x88] sm:$0xff] %vm2182, %v2145
        %2201 = vst.msk [vmem:[%s675 + $0x90] sm:$0xff] %vm2182, %v2148
        %2202 = vst.msk [vmem:[%s675 + $0x98] sm:$0xff] %vm2182, %v2150
        %2203 = vst.msk [vmem:[%s675 + $0xa0] sm:$0xff] %vm2182, %v2153
        %2204 = vst.msk [vmem:[%s675 + $0xa8] sm:$0xff] %vm2182, %v2155
        %2205 = vst.msk [vmem:[%s675 + $0xb0] sm:$0xff] %vm2182, %v2158
        %2206 = vst.msk [vmem:[%s675 + $0xb8] sm:$0xff] %vm2182, %v2160
        %2207 = vst.msk [vmem:[%s675 + $0xc0] sm:$0xff] %vm2182, %v2163
        %2208 = vst.msk [vmem:[%s675 + $0xc8] sm:$0xff] %vm2182, %v2165
        %2209 = vst.msk [vmem:[%s675 + $0xd0] sm:$0xff] %vm2182, %v2168
        %2210 = vst.msk [vmem:[%s675 + $0xd8] sm:$0xff] %vm2182, %v2170
        %2211 = vst.msk [vmem:[%s675 + $0xe0] sm:$0xff] %vm2182, %v2173
        %2212 = vst.msk [vmem:[%s675 + $0xe8] sm:$0xff] %vm2182, %v2175
        %2213 = vst.msk [vmem:[%s675 + $0xf0] sm:$0xff] %vm2182, %v2178
        %2214 = vst.msk [vmem:[%s675 + $0xf8] sm:$0xff] %vm2182, %v2180
        %s2215 = smul.u32 32, %s21
        %p2216 = scmp.lt.s32.totalorder %s20, 1
        %s2217 = scalar_select %p2216, %s20, 1
        %p2218 = scmp.lt.s32.totalorder %s2215, 127
        %s2219 = scalar_select %p2218, %s2215, 127
        %s2220 = smul.addr %s2217, 128
        %s2221 = sadd.s32 %s2219, %s2220
        %s2222 = smul.addr %s2221, 8
        %s2223 = scalar_lea.vmem %s5, %s2222
        // Predicated region
        $region82: #{osg_decoder_forward.1} parent=76 // pred_check
          %p2224 = pneg %p160
        $region83: #{osg_decoder_forward.1} parent=76 // pred_check_branch
          %2226 = sbr.rel (%p2224) target = $region85
        $region84: #{osg_decoder_forward.1} parent=76 // pred_region
          %s2227 = smul.u32 32, %s21
        $region85: #{osg_decoder_forward.1} parent=76 // pred_fallthru
          _
      $region77: #{osg_decoder_forward.1} parent=5 // pred_fallthru
        _
      %p2228 = scmp.le.s32.totalorder 2, %s11
      // Predicated region
      $region86: #{osg_decoder_forward.1} parent=5 // pred_check
        %p2229 = pneg %p2228
      $region87: #{osg_decoder_forward.1} parent=5 // pred_check_branch
        %2231 = sbr.rel (%p2229) target = $region89
      $region88: #{osg_decoder_forward.1} parent=5 // pred_region
        %s2232 = ssub.s32 %s11, 2
        // Predicated region
        $region90: #{osg_decoder_forward.1} parent=88 // pred_check
          %p2233 = pneg %p166
        $region91: #{osg_decoder_forward.1} parent=88 // pred_check_branch
          %2235 = sbr.rel (%p2233) target = $region93
        $region92: #{osg_decoder_forward.1} parent=88 // pred_region
          %s2236 = smul.u32 32, %s23
          %p2237 = scmp.lt.s32.totalorder %s22, 1
          %s2238 = scalar_select %p2237, %s22, 1
          %p2239 = scmp.lt.s32.totalorder %s2236, 127
          %s2240 = scalar_select %p2239, %s2236, 127
          %s2241 = smul.addr %s2238, 128
          %s2242 = sadd.s32 %s2240, %s2241
          %s2243 = smul.addr %s2242, 8
          %s2244 = scalar_lea.vmem %s5, %s2243
        $region93: #{osg_decoder_forward.1} parent=88 // pred_fallthru
          _
      $region89: #{osg_decoder_forward.1} parent=5 // pred_fallthru
        _
    $region6: #{osg_decoder_forward.1} parent=1 // loop_footer
      %s15 = sadd.s32 1, %s11
    $region7: #{osg_decoder_forward.1} parent=1 // loop_footer_branch
      %10 = sbr.rel target = $region3
    $region8: #{osg_decoder_forward.1} parent=1 // loop_exit
      _

</llo_original>
